<compile_context>
chip_gen: v5e
topology: v5e:2x2
jax: 0.10.0
libtpu: 0.0.40
codegen_flags: <defaults>
</compile_context>

<pallas_src>
import functools

import jax
import jax.numpy as jnp
from jax.experimental import pallas as pl
from jax.experimental.pallas import tpu as pltpu


# ----------------------------- fused kernel -----------------------------
def _bilstm2_encoder_kernel(x_ref, xrev_ref,
                            m10_ref, m20_ref, b0_ref, whh0_ref,
                            m11_ref, m21_ref, b1_ref, whh1_ref,
                            hid_ref, max_ref, *, seq_len):
    """Fused 2-layer bidirectional LSTM encoder (whole batch, one invocation).

    x_ref/xrev_ref : (T*B, D)   time-major input / time-reversed input
    m1*/m2*        : (D_in, 8H) direction-split packed input-projection weights
    b*             : (1, 8H)    packed biases (ih + hh, both directions)
    whh*           : (2H, 8H)   block-"diagonal" recurrent weights
    hid_ref        : (B, T*2H)  lane-dense hidden output (reshaped in wrapper)
    max_ref        : (B, 2H)    max over time
    Gate-column layout: [i_f i_b | f_f f_b | g_f g_b | o_f o_b], blocks of H.
    """
    T = seq_len
    TB, _ = x_ref.shape
    Bt = TB // T
    H2, G2 = whh0_ref.shape          # (2H, 8H)
    H = H2 // 2
    f32 = jnp.float32

    # Static lane masks, built once as (1, N) and broadcast inside selects.
    lane = jax.lax.broadcasted_iota(jnp.int32, (1, G2), 1)
    g_mask = (lane >= 2 * H2) & (lane < 3 * H2)          # tanh on the g block
    out_lane = jax.lax.broadcasted_iota(jnp.int32, (1, H2), 1)
    fwd_half = out_lane < H

    def run_layer(xp, whh):
        """xp: (T*Bt, G2) time-selected gate pre-activations (bias included),
        time-major loop order (fwd cols read time t, bwd cols read time T-1-t).
        Returns hs[t]: (Bt, H2) = [h_fwd(loop t) | h_bwd(loop t)]."""
        h = jnp.zeros((Bt, H2), f32)
        c = jnp.zeros((Bt, G2), f32)     # full-width cell; only lanes [0, H2) used
        hs = []
        for t in range(T):               # T small & static: full unroll
            gates = xp[t * Bt:(t + 1) * Bt, :] + jnp.dot(
                h, whh, preferred_element_type=f32)
            # Full-width activations, all on the EUP slot.
            sig = pl.reciprocal(1.0 + jnp.exp(-gates), approx=True)
            act = jnp.where(g_mask, jnp.tanh(gates), sig)
            # Align f/g/o gate blocks onto lanes [0, H2) with XLU rolls.
            f_al = pltpu.roll(act, shift=G2 - H2, axis=1)
            g_al = pltpu.roll(act, shift=G2 - 2 * H2, axis=1)
            o_al = pltpu.roll(act, shift=G2 - 3 * H2, axis=1)
            # Full-width update; lanes >= H2 hold bounded junk that is never read.
            c = f_al * c + act * g_al
            h = (o_al * jnp.tanh(c))[:, :H2]   # prefix lane slice (offset 0)
            hs.append(h)
        return hs

    x = x_ref[...].astype(f32)
    x_rev = xrev_ref[...].astype(f32)

    # Layer 0: bulk input projection for every timestep, both directions,
    # already time-selected by the (M1, M2) weight split.
    xp0 = (jnp.dot(x, m10_ref[...], preferred_element_type=f32)
           + jnp.dot(x_rev, m20_ref[...], preferred_element_type=f32)
           + b0_ref[...])
    hs1 = run_layer(xp0, whh0_ref[...])

    # Layer 1 input: loop-order and reversed-loop-order stacks of layer-0 hiddens
    # (pure value concatenations of the same small per-step tensors).
    a = jnp.concatenate(hs1, axis=0)           # (T*Bt, H2)
    a_rev = jnp.concatenate(hs1[::-1], axis=0)
    xp1 = (jnp.dot(a, m11_ref[...], preferred_element_type=f32)
           + jnp.dot(a_rev, m21_ref[...], preferred_element_type=f32)
           + b1_ref[...])
    hs2 = run_layer(xp1, whh1_ref[...])

    # Epilogue: re-time-align the bwd half and store lane-dense (Bt, T*H2).
    outs = [jnp.where(fwd_half, hs2[t], hs2[T - 1 - t]) for t in range(T)]
    hid_ref[...] = jnp.concatenate(outs, axis=-1).astype(hid_ref.dtype)

    # max over time is invariant to the per-half time permutation.
    mx = hs2[0]
    for t in range(1, T):
        mx = jnp.maximum(mx, hs2[t])
    max_ref[...] = mx.astype(max_ref.dtype)


# ----------------------------- weight packing -----------------------------
def _interleave_cols(m_f, m_b, H):
    """Interleave per-gate column blocks -> [i_f i_b f_f f_b g_f g_b o_f o_b]."""
    blocks = []
    for g in range(4):
        blocks.append(m_f[..., g * H:(g + 1) * H])
        blocks.append(m_b[..., g * H:(g + 1) * H])
    return jnp.concatenate(blocks, axis=-1)


def _pack_layer(p_fwd, p_bwd, *, direction_split_input):
    """Pack one layer's fwd/bwd params.

    p_* = (W_ih (D_in, 4H), W_hh (H, 4H), bias (1, 4H)), PyTorch gate order i,f,g,o.
    Returns (M1, M2, bias_cat, W_hh_bd):
      * M1 is consumed from the loop-order (time-major) input stack,
      * M2 from the time-reversed stack,
    so  X @ M1 + X_rev @ M2  yields gate pre-activations already time-selected
    for both directions (fwd cols <- time t, bwd cols <- time T-1-t).
    For layers whose input is a previous biLSTM output (direction_split_input),
    the row halves carry opposite time alignments and are masked accordingly.
    """
    wih_f, whh_f, b_f = p_fwd
    wih_b, whh_b, b_b = p_bwd
    H = whh_f.shape[0]
    G2 = 8 * H

    wcat = _interleave_cols(wih_f, wih_b, H)                       # (D_in, 8H)
    fwd_cols = ((jnp.arange(G2) // H) % 2 == 0)[None, :]
    if direction_split_input:
        d_in = wcat.shape[0]
        row_bwd = (jnp.arange(d_in) >= H)[:, None]
        keep1 = jnp.where(row_bwd, ~fwd_cols, fwd_cols)
    else:
        keep1 = jnp.broadcast_to(fwd_cols, wcat.shape)
    m1 = jnp.where(keep1, wcat, 0.0)
    m2 = jnp.where(keep1, 0.0, wcat)

    zf = jnp.zeros_like(whh_f)
    whh_bd = jnp.concatenate([_interleave_cols(whh_f, zf, H),      # rows: h_fwd
                              _interleave_cols(zf, whh_b, H)],     # rows: h_bwd
                             axis=0)                                # (2H, 8H)
    b_cat = _interleave_cols(b_f, b_b, H)                           # (1, 8H)
    return m1, m2, b_cat, whh_bd


def pack_params(params):
    """params: list of 2 layers, each {'fwd': (wih, whh, b), 'bwd': (...)}."""
    assert len(params) == 2, "kernel is specialized for n_layers=2"
    packed = []
    for li, lp in enumerate(params):
        packed.extend(_pack_layer(lp["fwd"], lp["bwd"],
                                  direction_split_input=(li > 0)))
    return tuple(packed)


def init_params(key, d_hidden, n_layers=2):
    """PyTorch-style uniform(-1/sqrt(H), 1/sqrt(H)) LSTM init."""
    H = d_hidden // 2
    k = 1.0 / jnp.sqrt(H)
    params = []
    for layer in range(n_layers):
        d_in = d_hidden if layer == 0 else 2 * H
        layer_params = {}
        for direction in ("fwd", "bwd"):
            key, k1, k2, k3, k4 = jax.random.split(key, 5)
            wih = jax.random.uniform(k1, (d_in, 4 * H), jnp.float32, -k, k)
            whh = jax.random.uniform(k2, (H, 4 * H), jnp.float32, -k, k)
            b_ih = jax.random.uniform(k3, (4 * H,), jnp.float32, -k, k)
            b_hh = jax.random.uniform(k4, (4 * H,), jnp.float32, -k, k)
            layer_params[direction] = (wih, whh, (b_ih + b_hh).reshape(1, 4 * H))
        params.append(layer_params)
    return params


# ----------------------------- forward wrapper -----------------------------
@jax.jit
def base_lstm_encoder_forward(x, packed):
    """Returns (max_hidden_output (B, 2H), hidden_output (B, T, 2H))."""
    m10, m20, b0, whh0, m11, m21, b1, whh1 = packed
    B, T, D = x.shape
    H2, G2 = whh0.shape

    # Wrapper-side (free) layout work: time-major 2-D views + time-reversed copy.
    xt = jnp.swapaxes(x, 0, 1)                  # (T, B, D)
    x_tm = xt.reshape(T * B, D)
    x_tm_rev = xt[::-1].reshape(T * B, D)

    flops = (2 * 2 * (T * B) * D * G2           # layer-0 input projections
             + 2 * 2 * (T * B) * H2 * G2        # layer-1 input projections
             + 2 * T * 2 * B * H2 * G2          # recurrent matmuls
             + 2 * T * B * G2 * 12)             # gate elementwise math
    transcendentals = 2 * T * B * 4 * G2
    bytes_accessed = 4 * (2 * T * B * D                       # x + x_rev
                          + 2 * (2 * max(D, H2) * G2 + H2 * G2 + G2)  # weights
                          + B * T * H2 + B * H2)              # outputs

    kernel = functools.partial(_bilstm2_encoder_kernel, seq_len=T)
    hid_flat, max_h = pl.pallas_call(
        kernel,
        out_shape=(jax.ShapeDtypeStruct((B, T * H2), jnp.float32),   # lane-dense
                   jax.ShapeDtypeStruct((B, H2), jnp.float32)),
        cost_estimate=pl.CostEstimate(flops=flops,
                                      transcendentals=transcendentals,
                                      bytes_accessed=bytes_accessed),
    )(x_tm, x_tm_rev, m10, m20, b0, whh0, m11, m21, b1, whh1)

    hidden = hid_flat.reshape(B, T, H2)          # free metadata reshape
    return max_h, hidden


# ---------- pure-JAX reference (for correctness check) ----------
def _ref_lstm_dir(x, wih, whh, bias, reverse):
    if reverse:
        x = x[:, ::-1, :]
    B, T, D = x.shape
    H = whh.shape[0]
    b = bias.reshape(-1)

    def step(carry, xt):
        h, c = carry
        gates = xt @ wih + h @ whh + b
        i = jax.nn.sigmoid(gates[:, 0 * H:1 * H])
        f = jax.nn.sigmoid(gates[:, 1 * H:2 * H])
        g = jnp.tanh(gates[:, 2 * H:3 * H])
        o = jax.nn.sigmoid(gates[:, 3 * H:4 * H])
        c_new = f * c + i * g
        h_new = o * jnp.tanh(c_new)
        return (h_new, c_new), h_new

    h0 = jnp.zeros((B, H), jnp.float32)
    c0 = jnp.zeros((B, H), jnp.float32)
    _, hs = jax.lax.scan(step, (h0, c0), jnp.swapaxes(x, 0, 1))
    hs = jnp.swapaxes(hs, 0, 1)
    if reverse:
        hs = hs[:, ::-1, :]
    return hs


def _ref_forward(x, params):
    inp = x
    for lp in params:
        h_f = _ref_lstm_dir(inp, *lp["fwd"], reverse=False)
        h_b = _ref_lstm_dir(inp, *lp["bwd"], reverse=True)
        inp = jnp.concatenate([h_f, h_b], axis=-1)
    return jnp.max(inp, axis=1), inp


if __name__ == "__main__":
    # max_option_length (d_hidden) = 32 -> per-direction hidden H = 16
    batch, seq, d_hidden = 2, 8, 32

    key = jax.random.PRNGKey(0)
    key, kx = jax.random.split(key)
    x = jax.random.normal(kx, (batch, seq, d_hidden), jnp.float32)

    params = init_params(key, d_hidden, n_layers=2)
    packed = pack_params(params)

    max_h, hidden = base_lstm_encoder_forward(x, packed)
    jax.block_until_ready((max_h, hidden))

    assert hidden.shape == (batch, seq, d_hidden)
    assert max_h.shape == (batch, d_hidden)

    ref_max, ref_hidden = _ref_forward(x, params)
    # Tolerance loosened slightly vs. 1e-4: the sigmoid uses the EUP
    # approximate-reciprocal path (pl.reciprocal(..., approx=True)).
    assert jnp.allclose(hidden, ref_hidden, atol=5e-3, rtol=5e-3)
    assert jnp.allclose(max_h, ref_max, atol=5e-3, rtol=5e-3)

    print("KERNEL_OK")
</pallas_src>

<mosaic_0001>
module attributes {stable_mosaic.version = 11 : i64} {
  func.func @_bilstm2_encoder_kernel(%arg0: memref<16x32xf32, #tpu.memory_space<vmem>>, %arg1: memref<16x32xf32, #tpu.memory_space<vmem>>, %arg2: memref<32x128xf32, #tpu.memory_space<vmem>>, %arg3: memref<32x128xf32, #tpu.memory_space<vmem>>, %arg4: memref<1x128xf32, #tpu.memory_space<vmem>>, %arg5: memref<32x128xf32, #tpu.memory_space<vmem>>, %arg6: memref<32x128xf32, #tpu.memory_space<vmem>>, %arg7: memref<32x128xf32, #tpu.memory_space<vmem>>, %arg8: memref<1x128xf32, #tpu.memory_space<vmem>>, %arg9: memref<32x128xf32, #tpu.memory_space<vmem>>, %arg10: memref<2x256xf32, #tpu.memory_space<vmem>>, %arg11: memref<2x32xf32, #tpu.memory_space<vmem>>) attributes {dimension_semantics = [], scalar_prefetch = 0 : i64, scratch_operands = 0 : i64, tpu.core_type = #tpu.core_type<tc>} {
    %0 = tpu.iota {dimensions = array<i32: 1>} : vector<1x128xi32>
    %c64_i32 = arith.constant 64 : i32
    %1 = vector.broadcast %c64_i32 : i32 to vector<1x128xi32>
    %2 = arith.cmpi sge, %0, %1 : vector<1x128xi32>
    %c96_i32 = arith.constant 96 : i32
    %3 = vector.broadcast %c96_i32 : i32 to vector<1x128xi32>
    %4 = arith.cmpi slt, %0, %3 : vector<1x128xi32>
    %5 = arith.andi %2, %4 : vector<1x128xi1>
    %6 = tpu.iota {dimensions = array<i32: 1>} : vector<1x32xi32>
    %c16_i32 = arith.constant 16 : i32
    %7 = vector.broadcast %c16_i32 : i32 to vector<1x32xi32>
    %8 = arith.cmpi slt, %6, %7 : vector<1x32xi32>
    %c0 = arith.constant 0 : index
    %c0_0 = arith.constant 0 : index
    %9 = vector.load %arg0[%c0, %c0_0] : memref<16x32xf32, #tpu.memory_space<vmem>>, vector<16x32xf32>
    %c0_1 = arith.constant 0 : index
    %c0_2 = arith.constant 0 : index
    %10 = vector.load %arg1[%c0_1, %c0_2] : memref<16x32xf32, #tpu.memory_space<vmem>>, vector<16x32xf32>
    %c0_3 = arith.constant 0 : index
    %c0_4 = arith.constant 0 : index
    %11 = vector.load %arg2[%c0_3, %c0_4] : memref<32x128xf32, #tpu.memory_space<vmem>>, vector<32x128xf32>
    %cst = arith.constant dense<0.000000e+00> : vector<16x128xf32>
    %12 = tpu.matmul %9, %11, %cst {dimension_numbers = #tpu.dot_dimension_numbers<[1], [0], [0], [1], [0, 0, 1, 1], [], []>} : vector<16x32xf32>, vector<32x128xf32>, vector<16x128xf32> -> vector<16x128xf32>
    %c0_5 = arith.constant 0 : index
    %c0_6 = arith.constant 0 : index
    %13 = vector.load %arg3[%c0_5, %c0_6] : memref<32x128xf32, #tpu.memory_space<vmem>>, vector<32x128xf32>
    %cst_7 = arith.constant dense<0.000000e+00> : vector<16x128xf32>
    %14 = tpu.matmul %10, %13, %cst_7 {dimension_numbers = #tpu.dot_dimension_numbers<[1], [0], [0], [1], [0, 0, 1, 1], [], []>} : vector<16x32xf32>, vector<32x128xf32>, vector<16x128xf32> -> vector<16x128xf32>
    %15 = arith.addf %12, %14 : vector<16x128xf32>
    %c0_8 = arith.constant 0 : index
    %c0_9 = arith.constant 0 : index
    %16 = vector.load %arg4[%c0_8, %c0_9] : memref<1x128xf32, #tpu.memory_space<vmem>>, vector<1x128xf32>
    %17 = vector.broadcast %16 : vector<1x128xf32> to vector<16x128xf32>
    %18 = arith.addf %15, %17 : vector<16x128xf32>
    %c0_10 = arith.constant 0 : index
    %c0_11 = arith.constant 0 : index
    %19 = vector.load %arg5[%c0_10, %c0_11] : memref<32x128xf32, #tpu.memory_space<vmem>>, vector<32x128xf32>
    %cst_12 = arith.constant 0.000000e+00 : f32
    %20 = vector.broadcast %cst_12 : f32 to vector<2x32xf32>
    %cst_13 = arith.constant 0.000000e+00 : f32
    %21 = vector.broadcast %cst_13 : f32 to vector<2x128xf32>
    %22 = vector.extract_strided_slice %18 {offsets = [0, 0], sizes = [2, 128], strides = [1, 1]} : vector<16x128xf32> to vector<2x128xf32>
    %cst_14 = arith.constant dense<0.000000e+00> : vector<2x128xf32>
    %23 = tpu.matmul %20, %19, %cst_14 {dimension_numbers = #tpu.dot_dimension_numbers<[1], [0], [0], [1], [0, 0, 1, 1], [], []>} : vector<2x32xf32>, vector<32x128xf32>, vector<2x128xf32> -> vector<2x128xf32>
    %24 = arith.addf %22, %23 : vector<2x128xf32>
    %cst_15 = arith.constant 0.000000e+00 : f32
    %25 = vector.broadcast %cst_15 : f32 to vector<2x128xf32>
    %26 = arith.subf %25, %24 : vector<2x128xf32>
    %27 = math.exp %26 : vector<2x128xf32>
    %cst_16 = arith.constant 1.000000e+00 : f32
    %28 = vector.broadcast %cst_16 : f32 to vector<2x128xf32>
    %29 = arith.addf %28, %27 : vector<2x128xf32>
    %30 = tpu.reciprocal %29 {approx = true} : vector<2x128xf32> -> vector<2x128xf32>
    %31 = math.tanh %24 : vector<2x128xf32>
    %32 = vector.shape_cast %5 : vector<1x128xi1> to vector<1x128xi1>
    %33 = vector.broadcast %32 : vector<1x128xi1> to vector<2x128xi1>
    %34 = arith.select %33, %31, %30 : vector<2x128xi1>, vector<2x128xf32>
    %c96_i32_17 = arith.constant 96 : i32
    %35 = tpu.dynamic_rotate %34 by %c96_i32_17 dim 1 : vector<2x128xf32>, i32 -> vector<2x128xf32>
    %c64_i32_18 = arith.constant 64 : i32
    %36 = tpu.dynamic_rotate %34 by %c64_i32_18 dim 1 : vector<2x128xf32>, i32 -> vector<2x128xf32>
    %c32_i32 = arith.constant 32 : i32
    %37 = tpu.dynamic_rotate %34 by %c32_i32 dim 1 : vector<2x128xf32>, i32 -> vector<2x128xf32>
    %38 = arith.mulf %35, %21 : vector<2x128xf32>
    %39 = arith.mulf %34, %36 : vector<2x128xf32>
    %40 = arith.addf %38, %39 : vector<2x128xf32>
    %41 = math.tanh %40 : vector<2x128xf32>
    %42 = arith.mulf %37, %41 : vector<2x128xf32>
    %43 = vector.extract_strided_slice %42 {offsets = [0, 0], sizes = [2, 32], strides = [1, 1]} : vector<2x128xf32> to vector<2x32xf32>
    %44 = vector.extract_strided_slice %18 {offsets = [2, 0], sizes = [2, 128], strides = [1, 1]} : vector<16x128xf32> to vector<2x128xf32>
    %cst_19 = arith.constant dense<0.000000e+00> : vector<2x128xf32>
    %45 = tpu.matmul %43, %19, %cst_19 {dimension_numbers = #tpu.dot_dimension_numbers<[1], [0], [0], [1], [0, 0, 1, 1], [], []>} : vector<2x32xf32>, vector<32x128xf32>, vector<2x128xf32> -> vector<2x128xf32>
    %46 = arith.addf %44, %45 : vector<2x128xf32>
    %cst_20 = arith.constant 0.000000e+00 : f32
    %47 = vector.broadcast %cst_20 : f32 to vector<2x128xf32>
    %48 = arith.subf %47, %46 : vector<2x128xf32>
    %49 = math.exp %48 : vector<2x128xf32>
    %cst_21 = arith.constant 1.000000e+00 : f32
    %50 = vector.broadcast %cst_21 : f32 to vector<2x128xf32>
    %51 = arith.addf %50, %49 : vector<2x128xf32>
    %52 = tpu.reciprocal %51 {approx = true} : vector<2x128xf32> -> vector<2x128xf32>
    %53 = math.tanh %46 : vector<2x128xf32>
    %54 = vector.shape_cast %5 : vector<1x128xi1> to vector<1x128xi1>
    %55 = vector.broadcast %54 : vector<1x128xi1> to vector<2x128xi1>
    %56 = arith.select %55, %53, %52 : vector<2x128xi1>, vector<2x128xf32>
    %c96_i32_22 = arith.constant 96 : i32
    %57 = tpu.dynamic_rotate %56 by %c96_i32_22 dim 1 : vector<2x128xf32>, i32 -> vector<2x128xf32>
    %c64_i32_23 = arith.constant 64 : i32
    %58 = tpu.dynamic_rotate %56 by %c64_i32_23 dim 1 : vector<2x128xf32>, i32 -> vector<2x128xf32>
    %c32_i32_24 = arith.constant 32 : i32
    %59 = tpu.dynamic_rotate %56 by %c32_i32_24 dim 1 : vector<2x128xf32>, i32 -> vector<2x128xf32>
    %60 = arith.mulf %57, %40 : vector<2x128xf32>
    %61 = arith.mulf %56, %58 : vector<2x128xf32>
    %62 = arith.addf %60, %61 : vector<2x128xf32>
    %63 = math.tanh %62 : vector<2x128xf32>
    %64 = arith.mulf %59, %63 : vector<2x128xf32>
    %65 = vector.extract_strided_slice %64 {offsets = [0, 0], sizes = [2, 32], strides = [1, 1]} : vector<2x128xf32> to vector<2x32xf32>
    %66 = vector.extract_strided_slice %18 {offsets = [4, 0], sizes = [2, 128], strides = [1, 1]} : vector<16x128xf32> to vector<2x128xf32>
    %cst_25 = arith.constant dense<0.000000e+00> : vector<2x128xf32>
    %67 = tpu.matmul %65, %19, %cst_25 {dimension_numbers = #tpu.dot_dimension_numbers<[1], [0], [0], [1], [0, 0, 1, 1], [], []>} : vector<2x32xf32>, vector<32x128xf32>, vector<2x128xf32> -> vector<2x128xf32>
    %68 = arith.addf %66, %67 : vector<2x128xf32>
    %cst_26 = arith.constant 0.000000e+00 : f32
    %69 = vector.broadcast %cst_26 : f32 to vector<2x128xf32>
    %70 = arith.subf %69, %68 : vector<2x128xf32>
    %71 = math.exp %70 : vector<2x128xf32>
    %cst_27 = arith.constant 1.000000e+00 : f32
    %72 = vector.broadcast %cst_27 : f32 to vector<2x128xf32>
    %73 = arith.addf %72, %71 : vector<2x128xf32>
    %74 = tpu.reciprocal %73 {approx = true} : vector<2x128xf32> -> vector<2x128xf32>
    %75 = math.tanh %68 : vector<2x128xf32>
    %76 = vector.shape_cast %5 : vector<1x128xi1> to vector<1x128xi1>
    %77 = vector.broadcast %76 : vector<1x128xi1> to vector<2x128xi1>
    %78 = arith.select %77, %75, %74 : vector<2x128xi1>, vector<2x128xf32>
    %c96_i32_28 = arith.constant 96 : i32
    %79 = tpu.dynamic_rotate %78 by %c96_i32_28 dim 1 : vector<2x128xf32>, i32 -> vector<2x128xf32>
    %c64_i32_29 = arith.constant 64 : i32
    %80 = tpu.dynamic_rotate %78 by %c64_i32_29 dim 1 : vector<2x128xf32>, i32 -> vector<2x128xf32>
    %c32_i32_30 = arith.constant 32 : i32
    %81 = tpu.dynamic_rotate %78 by %c32_i32_30 dim 1 : vector<2x128xf32>, i32 -> vector<2x128xf32>
    %82 = arith.mulf %79, %62 : vector<2x128xf32>
    %83 = arith.mulf %78, %80 : vector<2x128xf32>
    %84 = arith.addf %82, %83 : vector<2x128xf32>
    %85 = math.tanh %84 : vector<2x128xf32>
    %86 = arith.mulf %81, %85 : vector<2x128xf32>
    %87 = vector.extract_strided_slice %86 {offsets = [0, 0], sizes = [2, 32], strides = [1, 1]} : vector<2x128xf32> to vector<2x32xf32>
    %88 = vector.extract_strided_slice %18 {offsets = [6, 0], sizes = [2, 128], strides = [1, 1]} : vector<16x128xf32> to vector<2x128xf32>
    %cst_31 = arith.constant dense<0.000000e+00> : vector<2x128xf32>
    %89 = tpu.matmul %87, %19, %cst_31 {dimension_numbers = #tpu.dot_dimension_numbers<[1], [0], [0], [1], [0, 0, 1, 1], [], []>} : vector<2x32xf32>, vector<32x128xf32>, vector<2x128xf32> -> vector<2x128xf32>
    %90 = arith.addf %88, %89 : vector<2x128xf32>
    %cst_32 = arith.constant 0.000000e+00 : f32
    %91 = vector.broadcast %cst_32 : f32 to vector<2x128xf32>
    %92 = arith.subf %91, %90 : vector<2x128xf32>
    %93 = math.exp %92 : vector<2x128xf32>
    %cst_33 = arith.constant 1.000000e+00 : f32
    %94 = vector.broadcast %cst_33 : f32 to vector<2x128xf32>
    %95 = arith.addf %94, %93 : vector<2x128xf32>
    %96 = tpu.reciprocal %95 {approx = true} : vector<2x128xf32> -> vector<2x128xf32>
    %97 = math.tanh %90 : vector<2x128xf32>
    %98 = vector.shape_cast %5 : vector<1x128xi1> to vector<1x128xi1>
    %99 = vector.broadcast %98 : vector<1x128xi1> to vector<2x128xi1>
    %100 = arith.select %99, %97, %96 : vector<2x128xi1>, vector<2x128xf32>
    %c96_i32_34 = arith.constant 96 : i32
    %101 = tpu.dynamic_rotate %100 by %c96_i32_34 dim 1 : vector<2x128xf32>, i32 -> vector<2x128xf32>
    %c64_i32_35 = arith.constant 64 : i32
    %102 = tpu.dynamic_rotate %100 by %c64_i32_35 dim 1 : vector<2x128xf32>, i32 -> vector<2x128xf32>
    %c32_i32_36 = arith.constant 32 : i32
    %103 = tpu.dynamic_rotate %100 by %c32_i32_36 dim 1 : vector<2x128xf32>, i32 -> vector<2x128xf32>
    %104 = arith.mulf %101, %84 : vector<2x128xf32>
    %105 = arith.mulf %100, %102 : vector<2x128xf32>
    %106 = arith.addf %104, %105 : vector<2x128xf32>
    %107 = math.tanh %106 : vector<2x128xf32>
    %108 = arith.mulf %103, %107 : vector<2x128xf32>
    %109 = vector.extract_strided_slice %108 {offsets = [0, 0], sizes = [2, 32], strides = [1, 1]} : vector<2x128xf32> to vector<2x32xf32>
    %110 = vector.extract_strided_slice %18 {offsets = [8, 0], sizes = [2, 128], strides = [1, 1]} : vector<16x128xf32> to vector<2x128xf32>
    %cst_37 = arith.constant dense<0.000000e+00> : vector<2x128xf32>
    %111 = tpu.matmul %109, %19, %cst_37 {dimension_numbers = #tpu.dot_dimension_numbers<[1], [0], [0], [1], [0, 0, 1, 1], [], []>} : vector<2x32xf32>, vector<32x128xf32>, vector<2x128xf32> -> vector<2x128xf32>
    %112 = arith.addf %110, %111 : vector<2x128xf32>
    %cst_38 = arith.constant 0.000000e+00 : f32
    %113 = vector.broadcast %cst_38 : f32 to vector<2x128xf32>
    %114 = arith.subf %113, %112 : vector<2x128xf32>
    %115 = math.exp %114 : vector<2x128xf32>
    %cst_39 = arith.constant 1.000000e+00 : f32
    %116 = vector.broadcast %cst_39 : f32 to vector<2x128xf32>
    %117 = arith.addf %116, %115 : vector<2x128xf32>
    %118 = tpu.reciprocal %117 {approx = true} : vector<2x128xf32> -> vector<2x128xf32>
    %119 = math.tanh %112 : vector<2x128xf32>
    %120 = vector.shape_cast %5 : vector<1x128xi1> to vector<1x128xi1>
    %121 = vector.broadcast %120 : vector<1x128xi1> to vector<2x128xi1>
    %122 = arith.select %121, %119, %118 : vector<2x128xi1>, vector<2x128xf32>
    %c96_i32_40 = arith.constant 96 : i32
    %123 = tpu.dynamic_rotate %122 by %c96_i32_40 dim 1 : vector<2x128xf32>, i32 -> vector<2x128xf32>
    %c64_i32_41 = arith.constant 64 : i32
    %124 = tpu.dynamic_rotate %122 by %c64_i32_41 dim 1 : vector<2x128xf32>, i32 -> vector<2x128xf32>
    %c32_i32_42 = arith.constant 32 : i32
    %125 = tpu.dynamic_rotate %122 by %c32_i32_42 dim 1 : vector<2x128xf32>, i32 -> vector<2x128xf32>
    %126 = arith.mulf %123, %106 : vector<2x128xf32>
    %127 = arith.mulf %122, %124 : vector<2x128xf32>
    %128 = arith.addf %126, %127 : vector<2x128xf32>
    %129 = math.tanh %128 : vector<2x128xf32>
    %130 = arith.mulf %125, %129 : vector<2x128xf32>
    %131 = vector.extract_strided_slice %130 {offsets = [0, 0], sizes = [2, 32], strides = [1, 1]} : vector<2x128xf32> to vector<2x32xf32>
    %132 = vector.extract_strided_slice %18 {offsets = [10, 0], sizes = [2, 128], strides = [1, 1]} : vector<16x128xf32> to vector<2x128xf32>
    %cst_43 = arith.constant dense<0.000000e+00> : vector<2x128xf32>
    %133 = tpu.matmul %131, %19, %cst_43 {dimension_numbers = #tpu.dot_dimension_numbers<[1], [0], [0], [1], [0, 0, 1, 1], [], []>} : vector<2x32xf32>, vector<32x128xf32>, vector<2x128xf32> -> vector<2x128xf32>
    %134 = arith.addf %132, %133 : vector<2x128xf32>
    %cst_44 = arith.constant 0.000000e+00 : f32
    %135 = vector.broadcast %cst_44 : f32 to vector<2x128xf32>
    %136 = arith.subf %135, %134 : vector<2x128xf32>
    %137 = math.exp %136 : vector<2x128xf32>
    %cst_45 = arith.constant 1.000000e+00 : f32
    %138 = vector.broadcast %cst_45 : f32 to vector<2x128xf32>
    %139 = arith.addf %138, %137 : vector<2x128xf32>
    %140 = tpu.reciprocal %139 {approx = true} : vector<2x128xf32> -> vector<2x128xf32>
    %141 = math.tanh %134 : vector<2x128xf32>
    %142 = vector.shape_cast %5 : vector<1x128xi1> to vector<1x128xi1>
    %143 = vector.broadcast %142 : vector<1x128xi1> to vector<2x128xi1>
    %144 = arith.select %143, %141, %140 : vector<2x128xi1>, vector<2x128xf32>
    %c96_i32_46 = arith.constant 96 : i32
    %145 = tpu.dynamic_rotate %144 by %c96_i32_46 dim 1 : vector<2x128xf32>, i32 -> vector<2x128xf32>
    %c64_i32_47 = arith.constant 64 : i32
    %146 = tpu.dynamic_rotate %144 by %c64_i32_47 dim 1 : vector<2x128xf32>, i32 -> vector<2x128xf32>
    %c32_i32_48 = arith.constant 32 : i32
    %147 = tpu.dynamic_rotate %144 by %c32_i32_48 dim 1 : vector<2x128xf32>, i32 -> vector<2x128xf32>
    %148 = arith.mulf %145, %128 : vector<2x128xf32>
    %149 = arith.mulf %144, %146 : vector<2x128xf32>
    %150 = arith.addf %148, %149 : vector<2x128xf32>
    %151 = math.tanh %150 : vector<2x128xf32>
    %152 = arith.mulf %147, %151 : vector<2x128xf32>
    %153 = vector.extract_strided_slice %152 {offsets = [0, 0], sizes = [2, 32], strides = [1, 1]} : vector<2x128xf32> to vector<2x32xf32>
    %154 = vector.extract_strided_slice %18 {offsets = [12, 0], sizes = [2, 128], strides = [1, 1]} : vector<16x128xf32> to vector<2x128xf32>
    %cst_49 = arith.constant dense<0.000000e+00> : vector<2x128xf32>
    %155 = tpu.matmul %153, %19, %cst_49 {dimension_numbers = #tpu.dot_dimension_numbers<[1], [0], [0], [1], [0, 0, 1, 1], [], []>} : vector<2x32xf32>, vector<32x128xf32>, vector<2x128xf32> -> vector<2x128xf32>
    %156 = arith.addf %154, %155 : vector<2x128xf32>
    %cst_50 = arith.constant 0.000000e+00 : f32
    %157 = vector.broadcast %cst_50 : f32 to vector<2x128xf32>
    %158 = arith.subf %157, %156 : vector<2x128xf32>
    %159 = math.exp %158 : vector<2x128xf32>
    %cst_51 = arith.constant 1.000000e+00 : f32
    %160 = vector.broadcast %cst_51 : f32 to vector<2x128xf32>
    %161 = arith.addf %160, %159 : vector<2x128xf32>
    %162 = tpu.reciprocal %161 {approx = true} : vector<2x128xf32> -> vector<2x128xf32>
    %163 = math.tanh %156 : vector<2x128xf32>
    %164 = vector.shape_cast %5 : vector<1x128xi1> to vector<1x128xi1>
    %165 = vector.broadcast %164 : vector<1x128xi1> to vector<2x128xi1>
    %166 = arith.select %165, %163, %162 : vector<2x128xi1>, vector<2x128xf32>
    %c96_i32_52 = arith.constant 96 : i32
    %167 = tpu.dynamic_rotate %166 by %c96_i32_52 dim 1 : vector<2x128xf32>, i32 -> vector<2x128xf32>
    %c64_i32_53 = arith.constant 64 : i32
    %168 = tpu.dynamic_rotate %166 by %c64_i32_53 dim 1 : vector<2x128xf32>, i32 -> vector<2x128xf32>
    %c32_i32_54 = arith.constant 32 : i32
    %169 = tpu.dynamic_rotate %166 by %c32_i32_54 dim 1 : vector<2x128xf32>, i32 -> vector<2x128xf32>
    %170 = arith.mulf %167, %150 : vector<2x128xf32>
    %171 = arith.mulf %166, %168 : vector<2x128xf32>
    %172 = arith.addf %170, %171 : vector<2x128xf32>
    %173 = math.tanh %172 : vector<2x128xf32>
    %174 = arith.mulf %169, %173 : vector<2x128xf32>
    %175 = vector.extract_strided_slice %174 {offsets = [0, 0], sizes = [2, 32], strides = [1, 1]} : vector<2x128xf32> to vector<2x32xf32>
    %176 = vector.extract_strided_slice %18 {offsets = [14, 0], sizes = [2, 128], strides = [1, 1]} : vector<16x128xf32> to vector<2x128xf32>
    %cst_55 = arith.constant dense<0.000000e+00> : vector<2x128xf32>
    %177 = tpu.matmul %175, %19, %cst_55 {dimension_numbers = #tpu.dot_dimension_numbers<[1], [0], [0], [1], [0, 0, 1, 1], [], []>} : vector<2x32xf32>, vector<32x128xf32>, vector<2x128xf32> -> vector<2x128xf32>
    %178 = arith.addf %176, %177 : vector<2x128xf32>
    %cst_56 = arith.constant 0.000000e+00 : f32
    %179 = vector.broadcast %cst_56 : f32 to vector<2x128xf32>
    %180 = arith.subf %179, %178 : vector<2x128xf32>
    %181 = math.exp %180 : vector<2x128xf32>
    %cst_57 = arith.constant 1.000000e+00 : f32
    %182 = vector.broadcast %cst_57 : f32 to vector<2x128xf32>
    %183 = arith.addf %182, %181 : vector<2x128xf32>
    %184 = tpu.reciprocal %183 {approx = true} : vector<2x128xf32> -> vector<2x128xf32>
    %185 = math.tanh %178 : vector<2x128xf32>
    %186 = vector.shape_cast %5 : vector<1x128xi1> to vector<1x128xi1>
    %187 = vector.broadcast %186 : vector<1x128xi1> to vector<2x128xi1>
    %188 = arith.select %187, %185, %184 : vector<2x128xi1>, vector<2x128xf32>
    %c96_i32_58 = arith.constant 96 : i32
    %189 = tpu.dynamic_rotate %188 by %c96_i32_58 dim 1 : vector<2x128xf32>, i32 -> vector<2x128xf32>
    %c64_i32_59 = arith.constant 64 : i32
    %190 = tpu.dynamic_rotate %188 by %c64_i32_59 dim 1 : vector<2x128xf32>, i32 -> vector<2x128xf32>
    %c32_i32_60 = arith.constant 32 : i32
    %191 = tpu.dynamic_rotate %188 by %c32_i32_60 dim 1 : vector<2x128xf32>, i32 -> vector<2x128xf32>
    %192 = arith.mulf %189, %172 : vector<2x128xf32>
    %193 = arith.mulf %188, %190 : vector<2x128xf32>
    %194 = arith.addf %192, %193 : vector<2x128xf32>
    %195 = math.tanh %194 : vector<2x128xf32>
    %196 = arith.mulf %191, %195 : vector<2x128xf32>
    %197 = vector.extract_strided_slice %196 {offsets = [0, 0], sizes = [2, 32], strides = [1, 1]} : vector<2x128xf32> to vector<2x32xf32>
    %198 = tpu.concatenate %43, %65, %87, %109, %131, %153, %175, %197 in 0 : vector<2x32xf32>, vector<2x32xf32>, vector<2x32xf32>, vector<2x32xf32>, vector<2x32xf32>, vector<2x32xf32>, vector<2x32xf32>, vector<2x32xf32> -> vector<16x32xf32>
    %199 = tpu.concatenate %197, %175, %153, %131, %109, %87, %65, %43 in 0 : vector<2x32xf32>, vector<2x32xf32>, vector<2x32xf32>, vector<2x32xf32>, vector<2x32xf32>, vector<2x32xf32>, vector<2x32xf32>, vector<2x32xf32> -> vector<16x32xf32>
    %c0_61 = arith.constant 0 : index
    %c0_62 = arith.constant 0 : index
    %200 = vector.load %arg6[%c0_61, %c0_62] : memref<32x128xf32, #tpu.memory_space<vmem>>, vector<32x128xf32>
    %cst_63 = arith.constant dense<0.000000e+00> : vector<16x128xf32>
    %201 = tpu.matmul %198, %200, %cst_63 {dimension_numbers = #tpu.dot_dimension_numbers<[1], [0], [0], [1], [0, 0, 1, 1], [], []>} : vector<16x32xf32>, vector<32x128xf32>, vector<16x128xf32> -> vector<16x128xf32>
    %c0_64 = arith.constant 0 : index
    %c0_65 = arith.constant 0 : index
    %202 = vector.load %arg7[%c0_64, %c0_65] : memref<32x128xf32, #tpu.memory_space<vmem>>, vector<32x128xf32>
    %cst_66 = arith.constant dense<0.000000e+00> : vector<16x128xf32>
    %203 = tpu.matmul %199, %202, %cst_66 {dimension_numbers = #tpu.dot_dimension_numbers<[1], [0], [0], [1], [0, 0, 1, 1], [], []>} : vector<16x32xf32>, vector<32x128xf32>, vector<16x128xf32> -> vector<16x128xf32>
    %204 = arith.addf %201, %203 : vector<16x128xf32>
    %c0_67 = arith.constant 0 : index
    %c0_68 = arith.constant 0 : index
    %205 = vector.load %arg8[%c0_67, %c0_68] : memref<1x128xf32, #tpu.memory_space<vmem>>, vector<1x128xf32>
    %206 = vector.broadcast %205 : vector<1x128xf32> to vector<16x128xf32>
    %207 = arith.addf %204, %206 : vector<16x128xf32>
    %c0_69 = arith.constant 0 : index
    %c0_70 = arith.constant 0 : index
    %208 = vector.load %arg9[%c0_69, %c0_70] : memref<32x128xf32, #tpu.memory_space<vmem>>, vector<32x128xf32>
    %cst_71 = arith.constant 0.000000e+00 : f32
    %209 = vector.broadcast %cst_71 : f32 to vector<2x32xf32>
    %cst_72 = arith.constant 0.000000e+00 : f32
    %210 = vector.broadcast %cst_72 : f32 to vector<2x128xf32>
    %211 = vector.extract_strided_slice %207 {offsets = [0, 0], sizes = [2, 128], strides = [1, 1]} : vector<16x128xf32> to vector<2x128xf32>
    %cst_73 = arith.constant dense<0.000000e+00> : vector<2x128xf32>
    %212 = tpu.matmul %209, %208, %cst_73 {dimension_numbers = #tpu.dot_dimension_numbers<[1], [0], [0], [1], [0, 0, 1, 1], [], []>} : vector<2x32xf32>, vector<32x128xf32>, vector<2x128xf32> -> vector<2x128xf32>
    %213 = arith.addf %211, %212 : vector<2x128xf32>
    %cst_74 = arith.constant 0.000000e+00 : f32
    %214 = vector.broadcast %cst_74 : f32 to vector<2x128xf32>
    %215 = arith.subf %214, %213 : vector<2x128xf32>
    %216 = math.exp %215 : vector<2x128xf32>
    %cst_75 = arith.constant 1.000000e+00 : f32
    %217 = vector.broadcast %cst_75 : f32 to vector<2x128xf32>
    %218 = arith.addf %217, %216 : vector<2x128xf32>
    %219 = tpu.reciprocal %218 {approx = true} : vector<2x128xf32> -> vector<2x128xf32>
    %220 = math.tanh %213 : vector<2x128xf32>
    %221 = vector.shape_cast %5 : vector<1x128xi1> to vector<1x128xi1>
    %222 = vector.broadcast %221 : vector<1x128xi1> to vector<2x128xi1>
    %223 = arith.select %222, %220, %219 : vector<2x128xi1>, vector<2x128xf32>
    %c96_i32_76 = arith.constant 96 : i32
    %224 = tpu.dynamic_rotate %223 by %c96_i32_76 dim 1 : vector<2x128xf32>, i32 -> vector<2x128xf32>
    %c64_i32_77 = arith.constant 64 : i32
    %225 = tpu.dynamic_rotate %223 by %c64_i32_77 dim 1 : vector<2x128xf32>, i32 -> vector<2x128xf32>
    %c32_i32_78 = arith.constant 32 : i32
    %226 = tpu.dynamic_rotate %223 by %c32_i32_78 dim 1 : vector<2x128xf32>, i32 -> vector<2x128xf32>
    %227 = arith.mulf %224, %210 : vector<2x128xf32>
    %228 = arith.mulf %223, %225 : vector<2x128xf32>
    %229 = arith.addf %227, %228 : vector<2x128xf32>
    %230 = math.tanh %229 : vector<2x128xf32>
    %231 = arith.mulf %226, %230 : vector<2x128xf32>
    %232 = vector.extract_strided_slice %231 {offsets = [0, 0], sizes = [2, 32], strides = [1, 1]} : vector<2x128xf32> to vector<2x32xf32>
    %233 = vector.extract_strided_slice %207 {offsets = [2, 0], sizes = [2, 128], strides = [1, 1]} : vector<16x128xf32> to vector<2x128xf32>
    %cst_79 = arith.constant dense<0.000000e+00> : vector<2x128xf32>
    %234 = tpu.matmul %232, %208, %cst_79 {dimension_numbers = #tpu.dot_dimension_numbers<[1], [0], [0], [1], [0, 0, 1, 1], [], []>} : vector<2x32xf32>, vector<32x128xf32>, vector<2x128xf32> -> vector<2x128xf32>
    %235 = arith.addf %233, %234 : vector<2x128xf32>
    %cst_80 = arith.constant 0.000000e+00 : f32
    %236 = vector.broadcast %cst_80 : f32 to vector<2x128xf32>
    %237 = arith.subf %236, %235 : vector<2x128xf32>
    %238 = math.exp %237 : vector<2x128xf32>
    %cst_81 = arith.constant 1.000000e+00 : f32
    %239 = vector.broadcast %cst_81 : f32 to vector<2x128xf32>
    %240 = arith.addf %239, %238 : vector<2x128xf32>
    %241 = tpu.reciprocal %240 {approx = true} : vector<2x128xf32> -> vector<2x128xf32>
    %242 = math.tanh %235 : vector<2x128xf32>
    %243 = vector.shape_cast %5 : vector<1x128xi1> to vector<1x128xi1>
    %244 = vector.broadcast %243 : vector<1x128xi1> to vector<2x128xi1>
    %245 = arith.select %244, %242, %241 : vector<2x128xi1>, vector<2x128xf32>
    %c96_i32_82 = arith.constant 96 : i32
    %246 = tpu.dynamic_rotate %245 by %c96_i32_82 dim 1 : vector<2x128xf32>, i32 -> vector<2x128xf32>
    %c64_i32_83 = arith.constant 64 : i32
    %247 = tpu.dynamic_rotate %245 by %c64_i32_83 dim 1 : vector<2x128xf32>, i32 -> vector<2x128xf32>
    %c32_i32_84 = arith.constant 32 : i32
    %248 = tpu.dynamic_rotate %245 by %c32_i32_84 dim 1 : vector<2x128xf32>, i32 -> vector<2x128xf32>
    %249 = arith.mulf %246, %229 : vector<2x128xf32>
    %250 = arith.mulf %245, %247 : vector<2x128xf32>
    %251 = arith.addf %249, %250 : vector<2x128xf32>
    %252 = math.tanh %251 : vector<2x128xf32>
    %253 = arith.mulf %248, %252 : vector<2x128xf32>
    %254 = vector.extract_strided_slice %253 {offsets = [0, 0], sizes = [2, 32], strides = [1, 1]} : vector<2x128xf32> to vector<2x32xf32>
    %255 = vector.extract_strided_slice %207 {offsets = [4, 0], sizes = [2, 128], strides = [1, 1]} : vector<16x128xf32> to vector<2x128xf32>
    %cst_85 = arith.constant dense<0.000000e+00> : vector<2x128xf32>
    %256 = tpu.matmul %254, %208, %cst_85 {dimension_numbers = #tpu.dot_dimension_numbers<[1], [0], [0], [1], [0, 0, 1, 1], [], []>} : vector<2x32xf32>, vector<32x128xf32>, vector<2x128xf32> -> vector<2x128xf32>
    %257 = arith.addf %255, %256 : vector<2x128xf32>
    %cst_86 = arith.constant 0.000000e+00 : f32
    %258 = vector.broadcast %cst_86 : f32 to vector<2x128xf32>
    %259 = arith.subf %258, %257 : vector<2x128xf32>
    %260 = math.exp %259 : vector<2x128xf32>
    %cst_87 = arith.constant 1.000000e+00 : f32
    %261 = vector.broadcast %cst_87 : f32 to vector<2x128xf32>
    %262 = arith.addf %261, %260 : vector<2x128xf32>
    %263 = tpu.reciprocal %262 {approx = true} : vector<2x128xf32> -> vector<2x128xf32>
    %264 = math.tanh %257 : vector<2x128xf32>
    %265 = vector.shape_cast %5 : vector<1x128xi1> to vector<1x128xi1>
    %266 = vector.broadcast %265 : vector<1x128xi1> to vector<2x128xi1>
    %267 = arith.select %266, %264, %263 : vector<2x128xi1>, vector<2x128xf32>
    %c96_i32_88 = arith.constant 96 : i32
    %268 = tpu.dynamic_rotate %267 by %c96_i32_88 dim 1 : vector<2x128xf32>, i32 -> vector<2x128xf32>
    %c64_i32_89 = arith.constant 64 : i32
    %269 = tpu.dynamic_rotate %267 by %c64_i32_89 dim 1 : vector<2x128xf32>, i32 -> vector<2x128xf32>
    %c32_i32_90 = arith.constant 32 : i32
    %270 = tpu.dynamic_rotate %267 by %c32_i32_90 dim 1 : vector<2x128xf32>, i32 -> vector<2x128xf32>
    %271 = arith.mulf %268, %251 : vector<2x128xf32>
    %272 = arith.mulf %267, %269 : vector<2x128xf32>
    %273 = arith.addf %271, %272 : vector<2x128xf32>
    %274 = math.tanh %273 : vector<2x128xf32>
    %275 = arith.mulf %270, %274 : vector<2x128xf32>
    %276 = vector.extract_strided_slice %275 {offsets = [0, 0], sizes = [2, 32], strides = [1, 1]} : vector<2x128xf32> to vector<2x32xf32>
    %277 = vector.extract_strided_slice %207 {offsets = [6, 0], sizes = [2, 128], strides = [1, 1]} : vector<16x128xf32> to vector<2x128xf32>
    %cst_91 = arith.constant dense<0.000000e+00> : vector<2x128xf32>
    %278 = tpu.matmul %276, %208, %cst_91 {dimension_numbers = #tpu.dot_dimension_numbers<[1], [0], [0], [1], [0, 0, 1, 1], [], []>} : vector<2x32xf32>, vector<32x128xf32>, vector<2x128xf32> -> vector<2x128xf32>
    %279 = arith.addf %277, %278 : vector<2x128xf32>
    %cst_92 = arith.constant 0.000000e+00 : f32
    %280 = vector.broadcast %cst_92 : f32 to vector<2x128xf32>
    %281 = arith.subf %280, %279 : vector<2x128xf32>
    %282 = math.exp %281 : vector<2x128xf32>
    %cst_93 = arith.constant 1.000000e+00 : f32
    %283 = vector.broadcast %cst_93 : f32 to vector<2x128xf32>
    %284 = arith.addf %283, %282 : vector<2x128xf32>
    %285 = tpu.reciprocal %284 {approx = true} : vector<2x128xf32> -> vector<2x128xf32>
    %286 = math.tanh %279 : vector<2x128xf32>
    %287 = vector.shape_cast %5 : vector<1x128xi1> to vector<1x128xi1>
    %288 = vector.broadcast %287 : vector<1x128xi1> to vector<2x128xi1>
    %289 = arith.select %288, %286, %285 : vector<2x128xi1>, vector<2x128xf32>
    %c96_i32_94 = arith.constant 96 : i32
    %290 = tpu.dynamic_rotate %289 by %c96_i32_94 dim 1 : vector<2x128xf32>, i32 -> vector<2x128xf32>
    %c64_i32_95 = arith.constant 64 : i32
    %291 = tpu.dynamic_rotate %289 by %c64_i32_95 dim 1 : vector<2x128xf32>, i32 -> vector<2x128xf32>
    %c32_i32_96 = arith.constant 32 : i32
    %292 = tpu.dynamic_rotate %289 by %c32_i32_96 dim 1 : vector<2x128xf32>, i32 -> vector<2x128xf32>
    %293 = arith.mulf %290, %273 : vector<2x128xf32>
    %294 = arith.mulf %289, %291 : vector<2x128xf32>
    %295 = arith.addf %293, %294 : vector<2x128xf32>
    %296 = math.tanh %295 : vector<2x128xf32>
    %297 = arith.mulf %292, %296 : vector<2x128xf32>
    %298 = vector.extract_strided_slice %297 {offsets = [0, 0], sizes = [2, 32], strides = [1, 1]} : vector<2x128xf32> to vector<2x32xf32>
    %299 = vector.extract_strided_slice %207 {offsets = [8, 0], sizes = [2, 128], strides = [1, 1]} : vector<16x128xf32> to vector<2x128xf32>
    %cst_97 = arith.constant dense<0.000000e+00> : vector<2x128xf32>
    %300 = tpu.matmul %298, %208, %cst_97 {dimension_numbers = #tpu.dot_dimension_numbers<[1], [0], [0], [1], [0, 0, 1, 1], [], []>} : vector<2x32xf32>, vector<32x128xf32>, vector<2x128xf32> -> vector<2x128xf32>
    %301 = arith.addf %299, %300 : vector<2x128xf32>
    %cst_98 = arith.constant 0.000000e+00 : f32
    %302 = vector.broadcast %cst_98 : f32 to vector<2x128xf32>
    %303 = arith.subf %302, %301 : vector<2x128xf32>
    %304 = math.exp %303 : vector<2x128xf32>
    %cst_99 = arith.constant 1.000000e+00 : f32
    %305 = vector.broadcast %cst_99 : f32 to vector<2x128xf32>
    %306 = arith.addf %305, %304 : vector<2x128xf32>
    %307 = tpu.reciprocal %306 {approx = true} : vector<2x128xf32> -> vector<2x128xf32>
    %308 = math.tanh %301 : vector<2x128xf32>
    %309 = vector.shape_cast %5 : vector<1x128xi1> to vector<1x128xi1>
    %310 = vector.broadcast %309 : vector<1x128xi1> to vector<2x128xi1>
    %311 = arith.select %310, %308, %307 : vector<2x128xi1>, vector<2x128xf32>
    %c96_i32_100 = arith.constant 96 : i32
    %312 = tpu.dynamic_rotate %311 by %c96_i32_100 dim 1 : vector<2x128xf32>, i32 -> vector<2x128xf32>
    %c64_i32_101 = arith.constant 64 : i32
    %313 = tpu.dynamic_rotate %311 by %c64_i32_101 dim 1 : vector<2x128xf32>, i32 -> vector<2x128xf32>
    %c32_i32_102 = arith.constant 32 : i32
    %314 = tpu.dynamic_rotate %311 by %c32_i32_102 dim 1 : vector<2x128xf32>, i32 -> vector<2x128xf32>
    %315 = arith.mulf %312, %295 : vector<2x128xf32>
    %316 = arith.mulf %311, %313 : vector<2x128xf32>
    %317 = arith.addf %315, %316 : vector<2x128xf32>
    %318 = math.tanh %317 : vector<2x128xf32>
    %319 = arith.mulf %314, %318 : vector<2x128xf32>
    %320 = vector.extract_strided_slice %319 {offsets = [0, 0], sizes = [2, 32], strides = [1, 1]} : vector<2x128xf32> to vector<2x32xf32>
    %321 = vector.extract_strided_slice %207 {offsets = [10, 0], sizes = [2, 128], strides = [1, 1]} : vector<16x128xf32> to vector<2x128xf32>
    %cst_103 = arith.constant dense<0.000000e+00> : vector<2x128xf32>
    %322 = tpu.matmul %320, %208, %cst_103 {dimension_numbers = #tpu.dot_dimension_numbers<[1], [0], [0], [1], [0, 0, 1, 1], [], []>} : vector<2x32xf32>, vector<32x128xf32>, vector<2x128xf32> -> vector<2x128xf32>
    %323 = arith.addf %321, %322 : vector<2x128xf32>
    %cst_104 = arith.constant 0.000000e+00 : f32
    %324 = vector.broadcast %cst_104 : f32 to vector<2x128xf32>
    %325 = arith.subf %324, %323 : vector<2x128xf32>
    %326 = math.exp %325 : vector<2x128xf32>
    %cst_105 = arith.constant 1.000000e+00 : f32
    %327 = vector.broadcast %cst_105 : f32 to vector<2x128xf32>
    %328 = arith.addf %327, %326 : vector<2x128xf32>
    %329 = tpu.reciprocal %328 {approx = true} : vector<2x128xf32> -> vector<2x128xf32>
    %330 = math.tanh %323 : vector<2x128xf32>
    %331 = vector.shape_cast %5 : vector<1x128xi1> to vector<1x128xi1>
    %332 = vector.broadcast %331 : vector<1x128xi1> to vector<2x128xi1>
    %333 = arith.select %332, %330, %329 : vector<2x128xi1>, vector<2x128xf32>
    %c96_i32_106 = arith.constant 96 : i32
    %334 = tpu.dynamic_rotate %333 by %c96_i32_106 dim 1 : vector<2x128xf32>, i32 -> vector<2x128xf32>
    %c64_i32_107 = arith.constant 64 : i32
    %335 = tpu.dynamic_rotate %333 by %c64_i32_107 dim 1 : vector<2x128xf32>, i32 -> vector<2x128xf32>
    %c32_i32_108 = arith.constant 32 : i32
    %336 = tpu.dynamic_rotate %333 by %c32_i32_108 dim 1 : vector<2x128xf32>, i32 -> vector<2x128xf32>
    %337 = arith.mulf %334, %317 : vector<2x128xf32>
    %338 = arith.mulf %333, %335 : vector<2x128xf32>
    %339 = arith.addf %337, %338 : vector<2x128xf32>
    %340 = math.tanh %339 : vector<2x128xf32>
    %341 = arith.mulf %336, %340 : vector<2x128xf32>
    %342 = vector.extract_strided_slice %341 {offsets = [0, 0], sizes = [2, 32], strides = [1, 1]} : vector<2x128xf32> to vector<2x32xf32>
    %343 = vector.extract_strided_slice %207 {offsets = [12, 0], sizes = [2, 128], strides = [1, 1]} : vector<16x128xf32> to vector<2x128xf32>
    %cst_109 = arith.constant dense<0.000000e+00> : vector<2x128xf32>
    %344 = tpu.matmul %342, %208, %cst_109 {dimension_numbers = #tpu.dot_dimension_numbers<[1], [0], [0], [1], [0, 0, 1, 1], [], []>} : vector<2x32xf32>, vector<32x128xf32>, vector<2x128xf32> -> vector<2x128xf32>
    %345 = arith.addf %343, %344 : vector<2x128xf32>
    %cst_110 = arith.constant 0.000000e+00 : f32
    %346 = vector.broadcast %cst_110 : f32 to vector<2x128xf32>
    %347 = arith.subf %346, %345 : vector<2x128xf32>
    %348 = math.exp %347 : vector<2x128xf32>
    %cst_111 = arith.constant 1.000000e+00 : f32
    %349 = vector.broadcast %cst_111 : f32 to vector<2x128xf32>
    %350 = arith.addf %349, %348 : vector<2x128xf32>
    %351 = tpu.reciprocal %350 {approx = true} : vector<2x128xf32> -> vector<2x128xf32>
    %352 = math.tanh %345 : vector<2x128xf32>
    %353 = vector.shape_cast %5 : vector<1x128xi1> to vector<1x128xi1>
    %354 = vector.broadcast %353 : vector<1x128xi1> to vector<2x128xi1>
    %355 = arith.select %354, %352, %351 : vector<2x128xi1>, vector<2x128xf32>
    %c96_i32_112 = arith.constant 96 : i32
    %356 = tpu.dynamic_rotate %355 by %c96_i32_112 dim 1 : vector<2x128xf32>, i32 -> vector<2x128xf32>
    %c64_i32_113 = arith.constant 64 : i32
    %357 = tpu.dynamic_rotate %355 by %c64_i32_113 dim 1 : vector<2x128xf32>, i32 -> vector<2x128xf32>
    %c32_i32_114 = arith.constant 32 : i32
    %358 = tpu.dynamic_rotate %355 by %c32_i32_114 dim 1 : vector<2x128xf32>, i32 -> vector<2x128xf32>
    %359 = arith.mulf %356, %339 : vector<2x128xf32>
    %360 = arith.mulf %355, %357 : vector<2x128xf32>
    %361 = arith.addf %359, %360 : vector<2x128xf32>
    %362 = math.tanh %361 : vector<2x128xf32>
    %363 = arith.mulf %358, %362 : vector<2x128xf32>
    %364 = vector.extract_strided_slice %363 {offsets = [0, 0], sizes = [2, 32], strides = [1, 1]} : vector<2x128xf32> to vector<2x32xf32>
    %365 = vector.extract_strided_slice %207 {offsets = [14, 0], sizes = [2, 128], strides = [1, 1]} : vector<16x128xf32> to vector<2x128xf32>
    %cst_115 = arith.constant dense<0.000000e+00> : vector<2x128xf32>
    %366 = tpu.matmul %364, %208, %cst_115 {dimension_numbers = #tpu.dot_dimension_numbers<[1], [0], [0], [1], [0, 0, 1, 1], [], []>} : vector<2x32xf32>, vector<32x128xf32>, vector<2x128xf32> -> vector<2x128xf32>
    %367 = arith.addf %365, %366 : vector<2x128xf32>
    %cst_116 = arith.constant 0.000000e+00 : f32
    %368 = vector.broadcast %cst_116 : f32 to vector<2x128xf32>
    %369 = arith.subf %368, %367 : vector<2x128xf32>
    %370 = math.exp %369 : vector<2x128xf32>
    %cst_117 = arith.constant 1.000000e+00 : f32
    %371 = vector.broadcast %cst_117 : f32 to vector<2x128xf32>
    %372 = arith.addf %371, %370 : vector<2x128xf32>
    %373 = tpu.reciprocal %372 {approx = true} : vector<2x128xf32> -> vector<2x128xf32>
    %374 = math.tanh %367 : vector<2x128xf32>
    %375 = vector.shape_cast %5 : vector<1x128xi1> to vector<1x128xi1>
    %376 = vector.broadcast %375 : vector<1x128xi1> to vector<2x128xi1>
    %377 = arith.select %376, %374, %373 : vector<2x128xi1>, vector<2x128xf32>
    %c96_i32_118 = arith.constant 96 : i32
    %378 = tpu.dynamic_rotate %377 by %c96_i32_118 dim 1 : vector<2x128xf32>, i32 -> vector<2x128xf32>
    %c64_i32_119 = arith.constant 64 : i32
    %379 = tpu.dynamic_rotate %377 by %c64_i32_119 dim 1 : vector<2x128xf32>, i32 -> vector<2x128xf32>
    %c32_i32_120 = arith.constant 32 : i32
    %380 = tpu.dynamic_rotate %377 by %c32_i32_120 dim 1 : vector<2x128xf32>, i32 -> vector<2x128xf32>
    %381 = arith.mulf %378, %361 : vector<2x128xf32>
    %382 = arith.mulf %377, %379 : vector<2x128xf32>
    %383 = arith.addf %381, %382 : vector<2x128xf32>
    %384 = math.tanh %383 : vector<2x128xf32>
    %385 = arith.mulf %380, %384 : vector<2x128xf32>
    %386 = vector.extract_strided_slice %385 {offsets = [0, 0], sizes = [2, 32], strides = [1, 1]} : vector<2x128xf32> to vector<2x32xf32>
    %387 = vector.shape_cast %8 : vector<1x32xi1> to vector<1x32xi1>
    %388 = vector.broadcast %387 : vector<1x32xi1> to vector<2x32xi1>
    %389 = arith.select %388, %232, %386 : vector<2x32xi1>, vector<2x32xf32>
    %390 = vector.shape_cast %8 : vector<1x32xi1> to vector<1x32xi1>
    %391 = vector.broadcast %390 : vector<1x32xi1> to vector<2x32xi1>
    %392 = arith.select %391, %254, %364 : vector<2x32xi1>, vector<2x32xf32>
    %393 = vector.shape_cast %8 : vector<1x32xi1> to vector<1x32xi1>
    %394 = vector.broadcast %393 : vector<1x32xi1> to vector<2x32xi1>
    %395 = arith.select %394, %276, %342 : vector<2x32xi1>, vector<2x32xf32>
    %396 = vector.shape_cast %8 : vector<1x32xi1> to vector<1x32xi1>
    %397 = vector.broadcast %396 : vector<1x32xi1> to vector<2x32xi1>
    %398 = arith.select %397, %298, %320 : vector<2x32xi1>, vector<2x32xf32>
    %399 = vector.shape_cast %8 : vector<1x32xi1> to vector<1x32xi1>
    %400 = vector.broadcast %399 : vector<1x32xi1> to vector<2x32xi1>
    %401 = arith.select %400, %320, %298 : vector<2x32xi1>, vector<2x32xf32>
    %402 = vector.shape_cast %8 : vector<1x32xi1> to vector<1x32xi1>
    %403 = vector.broadcast %402 : vector<1x32xi1> to vector<2x32xi1>
    %404 = arith.select %403, %342, %276 : vector<2x32xi1>, vector<2x32xf32>
    %405 = vector.shape_cast %8 : vector<1x32xi1> to vector<1x32xi1>
    %406 = vector.broadcast %405 : vector<1x32xi1> to vector<2x32xi1>
    %407 = arith.select %406, %364, %254 : vector<2x32xi1>, vector<2x32xf32>
    %408 = vector.shape_cast %8 : vector<1x32xi1> to vector<1x32xi1>
    %409 = vector.broadcast %408 : vector<1x32xi1> to vector<2x32xi1>
    %410 = arith.select %409, %386, %232 : vector<2x32xi1>, vector<2x32xf32>
    %411 = tpu.concatenate %389, %392, %395, %398, %401, %404, %407, %410 in 1 : vector<2x32xf32>, vector<2x32xf32>, vector<2x32xf32>, vector<2x32xf32>, vector<2x32xf32>, vector<2x32xf32>, vector<2x32xf32>, vector<2x32xf32> -> vector<2x256xf32>
    %c0_121 = arith.constant 0 : index
    %c0_122 = arith.constant 0 : index
    %412 = vector.load %arg10[%c0_121, %c0_122] : memref<2x256xf32, #tpu.memory_space<vmem>>, vector<2x256xf32>
    tpu.vector_store %arg10[%c0_121, %c0_122], %411 {strides = array<i32>} : memref<2x256xf32, #tpu.memory_space<vmem>>, vector<2x256xf32>,
    %413 = arith.maximumf %232, %254 : vector<2x32xf32>
    %414 = arith.maximumf %413, %276 : vector<2x32xf32>
    %415 = arith.maximumf %414, %298 : vector<2x32xf32>
    %416 = arith.maximumf %415, %320 : vector<2x32xf32>
    %417 = arith.maximumf %416, %342 : vector<2x32xf32>
    %418 = arith.maximumf %417, %364 : vector<2x32xf32>
    %419 = arith.maximumf %418, %386 : vector<2x32xf32>
    %c0_123 = arith.constant 0 : index
    %c0_124 = arith.constant 0 : index
    %420 = vector.load %arg11[%c0_123, %c0_124] : memref<2x32xf32, #tpu.memory_space<vmem>>, vector<2x32xf32>
    tpu.vector_store %arg11[%c0_123, %c0_124], %419 {strides = array<i32>} : memref<2x32xf32, #tpu.memory_space<vmem>>, vector<2x32xf32>,
    return
  }
}

</mosaic_0001>

<llo_original>
// kernel: base_lstm_encoder_forward.1
$region0: #{base_lstm_encoder_forward.1}
  #allocation0 [shape = 'u32[]', space=smem, size = 0x4, offset = 0x4, fixed_abs, tag = 'smem constant byte address 0x4 - core index']
  #allocation1 [shape = 'u32[72,128]{1,0:T(1,128)}', space=vmem, size = 0x9000, scoped, tag = 'internal scratch']
  %s0 = inlined_call_operand.vmem [shape: f32[16,32], index: 0, kind: input, shape index: {}]
  %s1 = inlined_call_operand.vmem [shape: f32[16,32], index: 1, kind: input, shape index: {}]
  %s2 = inlined_call_operand.vmem [shape: f32[32,128], index: 2, kind: input, shape index: {}]
  %s3 = inlined_call_operand.vmem [shape: f32[32,128], index: 3, kind: input, shape index: {}]
  %s4 = inlined_call_operand.vmem [shape: f32[1,128], index: 4, kind: input, shape index: {}]
  %s5 = inlined_call_operand.hbm [shape: f32[32,128], index: 5, kind: input, shape index: {}]
  %s6 = inlined_call_operand.hbm [shape: f32[32,128], index: 6, kind: input, shape index: {}]
  %s7 = inlined_call_operand.hbm [shape: f32[32,128], index: 7, kind: input, shape index: {}]
  %s8 = inlined_call_operand.vmem [shape: f32[1,128], index: 8, kind: input, shape index: {}]
  %s9 = inlined_call_operand.hbm [shape: f32[32,128], index: 9, kind: input, shape index: {}]
  %s10 = inlined_call_operand.vmem [shape: f32[2,256], index: 10, kind: output, shape index: {0}]
  %s11 = inlined_call_operand.hbm [shape: f32[2,32], index: 11, kind: output, shape index: {1}]
  %12 = xla_tuple %s10, %s11
  %s13 = sld [smem:[#allocation0]]
  $region74: #{base_lstm_encoder_forward.1} parent=0
    _
  %s15 = ssub.s32 1, %s13
  %s16 = scalar_select 0, %s15, %s13
  $region1: #{base_lstm_encoder_forward.1} parent=0
    #allocation2 [shape = 'u8[16384]{0}', space=vmem, size = 0x4000, scoped, tag = 'input window, operand 5, single buffered']
    #allocation3 [shape = 's32[1]{0}', space=sflag, size = 0x4, scoped, tag = 'scoped memory for base_lstm_encoder_forward.1']
    #allocation4 [shape = 's32[1]{0}', space=sflag, size = 0x4, scoped, tag = 'scoped memory for base_lstm_encoder_forward.1']
    #allocation5 [shape = 'u8[16384]{0}', space=vmem, size = 0x4000, scoped, tag = 'input window, operand 6, single buffered']
    #allocation6 [shape = 's32[1]{0}', space=sflag, size = 0x4, scoped, tag = 'scoped memory for base_lstm_encoder_forward.1']
    #allocation7 [shape = 'u8[16384]{0}', space=vmem, size = 0x4000, scoped, tag = 'input window, operand 7, single buffered']
    #allocation8 [shape = 'u8[16384]{0}', space=vmem, size = 0x4000, scoped, tag = 'input window, operand 9, single buffered']
    #allocation9 [shape = 's32[1]{0}', space=sflag, size = 0x4, scoped, tag = 'scoped memory for base_lstm_encoder_forward.1']
    #allocation10 [shape = 'u8[1024]{0}', space=vmem, size = 0x400, scoped, tag = 'output window, operand 1, single buffered']
    %17 = vsyncpa [#allocation3], 0
    %18 = vsyncpa [#allocation6], 0
    %19 = vsyncpa [#allocation9], 0
    %20 = vsyncpa [#allocation4], 0
    // Predicated region
    $region2: #{base_lstm_encoder_forward.1} parent=1 // pred_check
      _
    $region3: #{base_lstm_encoder_forward.1} parent=1 // pred_check_branch
      %22 = sbr.rel (0) target = $region5
    $region4: #{base_lstm_encoder_forward.1} parent=1 // pred_region
      _
    $region5: #{base_lstm_encoder_forward.1} parent=1 // pred_fallthru
      _
    // Predicated region
    $region6: #{base_lstm_encoder_forward.1} parent=1 // pred_check
      _
    $region7: #{base_lstm_encoder_forward.1} parent=1 // pred_check_branch
      %24 = sbr.rel (0) target = $region9
    $region8: #{base_lstm_encoder_forward.1} parent=1 // pred_region
      _
    $region9: #{base_lstm_encoder_forward.1} parent=1 // pred_fallthru
      _
    // Predicated region
    $region10: #{base_lstm_encoder_forward.1} parent=1 // pred_check
      _
    $region11: #{base_lstm_encoder_forward.1} parent=1 // pred_check_branch
      %26 = sbr.rel (0) target = $region13
    $region12: #{base_lstm_encoder_forward.1} parent=1 // pred_region
      _
    $region13: #{base_lstm_encoder_forward.1} parent=1 // pred_fallthru
      _
    // Predicated region
    $region14: #{base_lstm_encoder_forward.1} parent=1 // pred_check
      _
    $region15: #{base_lstm_encoder_forward.1} parent=1 // pred_check_branch
      %28 = sbr.rel (0) target = $region17
    $region16: #{base_lstm_encoder_forward.1} parent=1 // pred_region
      _
    $region17: #{base_lstm_encoder_forward.1} parent=1 // pred_fallthru
      _
    // Predicated region
    $region18: #{base_lstm_encoder_forward.1} parent=1 // pred_check
      _
    $region19: #{base_lstm_encoder_forward.1} parent=1 // pred_check_branch
      %30 = sbr.rel (0) target = $region21
    $region20: #{base_lstm_encoder_forward.1} parent=1 // pred_region
      _
    $region21: #{base_lstm_encoder_forward.1} parent=1 // pred_fallthru
      _
    // Predicated region
    $region22: #{base_lstm_encoder_forward.1} parent=1 // pred_check
      _
    $region23: #{base_lstm_encoder_forward.1} parent=1 // pred_check_branch
      %32 = sbr.rel (0) target = $region25
    $region24: #{base_lstm_encoder_forward.1} parent=1 // pred_region
      %34 = vsyncadd [#allocation3], 0
      %s35 = sshll.u32 %s5, 4
      %s36 = int_to_ptr.hbm [resolvable:$true] %s35
      %s37 = sshll.u32 [#allocation2], 4
      %s38 = int_to_ptr.vmem [resolvable:$true] %s37
      %43 = dma.hbm_to_vmem [thread:$0]  %s36, 512, %s38, [#allocation3], 128, 128, 8
    $region25: #{base_lstm_encoder_forward.1} parent=1 // pred_fallthru
      _
    // Predicated region
    $region26: #{base_lstm_encoder_forward.1} parent=1 // pred_check
      _
    $region27: #{base_lstm_encoder_forward.1} parent=1 // pred_check_branch
      %45 = sbr.rel (0) target = $region29
    $region28: #{base_lstm_encoder_forward.1} parent=1 // pred_region
      %47 = vsyncadd [#allocation6], 0
      %s48 = sshll.u32 %s6, 4
      %s49 = int_to_ptr.hbm [resolvable:$true] %s48
      %s50 = sshll.u32 [#allocation5], 4
      %s51 = int_to_ptr.vmem [resolvable:$true] %s50
      %56 = dma.hbm_to_vmem [thread:$0]  %s49, 512, %s51, [#allocation6], 128, 128, 8
    $region29: #{base_lstm_encoder_forward.1} parent=1 // pred_fallthru
      _
    // Predicated region
    $region30: #{base_lstm_encoder_forward.1} parent=1 // pred_check
      _
    $region31: #{base_lstm_encoder_forward.1} parent=1 // pred_check_branch
      %58 = sbr.rel (0) target = $region33
    $region32: #{base_lstm_encoder_forward.1} parent=1 // pred_region
      %60 = vsyncadd [#allocation6], 0
      %s61 = sshll.u32 %s7, 4
      %s62 = int_to_ptr.hbm [resolvable:$true] %s61
      %s63 = sshll.u32 [#allocation7], 4
      %s64 = int_to_ptr.vmem [resolvable:$true] %s63
      %69 = dma.hbm_to_vmem [thread:$0]  %s62, 512, %s64, [#allocation6], 128, 128, 8
    $region33: #{base_lstm_encoder_forward.1} parent=1 // pred_fallthru
      _
    // Predicated region
    $region34: #{base_lstm_encoder_forward.1} parent=1 // pred_check
      _
    $region35: #{base_lstm_encoder_forward.1} parent=1 // pred_check_branch
      %71 = sbr.rel (0) target = $region37
    $region36: #{base_lstm_encoder_forward.1} parent=1 // pred_region
      _
    $region37: #{base_lstm_encoder_forward.1} parent=1 // pred_fallthru
      _
    // Predicated region
    $region38: #{base_lstm_encoder_forward.1} parent=1 // pred_check
      _
    $region39: #{base_lstm_encoder_forward.1} parent=1 // pred_check_branch
      %73 = sbr.rel (0) target = $region41
    $region40: #{base_lstm_encoder_forward.1} parent=1 // pred_region
      %75 = vsyncadd [#allocation9], 0
      %s76 = sshll.u32 %s9, 4
      %s77 = int_to_ptr.hbm [resolvable:$true] %s76
      %s78 = sshll.u32 [#allocation8], 4
      %s79 = int_to_ptr.vmem [resolvable:$true] %s78
      %84 = dma.hbm_to_vmem [thread:$0]  %s77, 512, %s79, [#allocation9], 128, 128, 8
    $region41: #{base_lstm_encoder_forward.1} parent=1 // pred_fallthru
      _
    // Predicated region
    $region42: #{base_lstm_encoder_forward.1} parent=1 // pred_check
      _
    $region43: #{base_lstm_encoder_forward.1} parent=1 // pred_check_branch
      %86 = sbr.rel (0) target = $region45
    $region44: #{base_lstm_encoder_forward.1} parent=1 // pred_region
      %88 = dma.done [#allocation3], 512
    $region45: #{base_lstm_encoder_forward.1} parent=1 // pred_fallthru
      _
    // Predicated region
    $region46: #{base_lstm_encoder_forward.1} parent=1 // pred_check
      _
    $region47: #{base_lstm_encoder_forward.1} parent=1 // pred_check_branch
      %90 = sbr.rel (0) target = $region49
    $region48: #{base_lstm_encoder_forward.1} parent=1 // pred_region
      %92 = dma.done [#allocation6], 512
    $region49: #{base_lstm_encoder_forward.1} parent=1 // pred_fallthru
      _
    // Predicated region
    $region50: #{base_lstm_encoder_forward.1} parent=1 // pred_check
      _
    $region51: #{base_lstm_encoder_forward.1} parent=1 // pred_check_branch
      %94 = sbr.rel (0) target = $region53
    $region52: #{base_lstm_encoder_forward.1} parent=1 // pred_region
      %96 = dma.done [#allocation6], 512
    $region53: #{base_lstm_encoder_forward.1} parent=1 // pred_fallthru
      _
    // Predicated region
    $region54: #{base_lstm_encoder_forward.1} parent=1 // pred_check
      _
    $region55: #{base_lstm_encoder_forward.1} parent=1 // pred_check_branch
      %98 = sbr.rel (0) target = $region57
    $region56: #{base_lstm_encoder_forward.1} parent=1 // pred_region
      %100 = dma.done [#allocation9], 512
    $region57: #{base_lstm_encoder_forward.1} parent=1 // pred_fallthru
      _
    %v101 = vlaneseq
    %v102 = vand.u32 %v101, 127
    %vm103 = vcmp.ge.s32.totalorder %v102, 64
    %vm104 = vcmp.lt.s32.totalorder %v102, 96
    %vm105 = vmand %vm103, %vm104
    %vm106 = vcmp.lt.s32.totalorder %v102, 16
    %v107 = vld [vmem:[%s0] sm:$0xff]
    %v108 = vld [vmem:[%s0 + $0x8] sm:$0xff]
    %v109 = vld [vmem:[%s1] sm:$0xff]
    %v110 = vld [vmem:[%s1 + $0x8] sm:$0xff]
    %v111 = vld [vmem:[%s2] sm:$0xff]
    %v112 = vld [vmem:[%s2 + $0x8] sm:$0xff]
    %v113 = vld [vmem:[%s2 + $0x10] sm:$0xff]
    %v114 = vld [vmem:[%s2 + $0x18] sm:$0xff]
    %v115 = vld [vmem:[%s3] sm:$0xff]
    %v116 = vld [vmem:[%s3 + $0x8] sm:$0xff]
    %v117 = vld [vmem:[%s3 + $0x10] sm:$0xff]
    %v118 = vld [vmem:[%s3 + $0x18] sm:$0xff]
    %vm119 = vcmask 261120
    %v121 = vsel %vm119, %v109, 0
    %v124 = vsel %vm119, %v110, 0
    %126 = vmatpush.msra.mxu0 0.0
    %127 = vmatpush.msra.mxu0 0.0
    %128 = vmatpush.msra.mxu0 0.0
    %129 = vmatpush.msra.mxu0 0.0
    %130 = vmatpush.msra.mxu0 0.0
    %131 = vmatpush.msra.mxu0 0.0
    %132 = vmatpush.msra.mxu0 0.0
    %133 = vmatpush.msra.mxu0 0.0
    %134 = vmatpush.msra.mxu0 0.0
    %135 = vmatpush.msra.mxu0 0.0
    %136 = vmatpush.msra.mxu0 0.0
    %137 = vmatpush.msra.mxu0 0.0
    %138 = vmatpush.msra.mxu0 %v118
    %139 = vmatpush.msra.mxu0 %v117
    %140 = vmatpush.msra.mxu0 %v116
    %141 = vmatpush.msra.mxu0 %v115
    %142 = vmatmul.f32.gmra.mxu0 %v121
    %v143 = vpop.f32.mrf.mxu0
    %v144 = vadd.f32 0.0, %v143
    %145 = vmatmul.f32.gmra.mxu0 %v124
    %v146 = vpop.f32.mrf.mxu0
    %v147 = vadd.f32 0.0, %v146
    %148 = vdwg.mxu0
    %v150 = vsel %vm119, %v107, 0
    %v153 = vsel %vm119, %v108, 0
    %155 = vmatpush.msra.mxu0 0.0
    %156 = vmatpush.msra.mxu0 0.0
    %157 = vmatpush.msra.mxu0 0.0
    %158 = vmatpush.msra.mxu0 0.0
    %159 = vmatpush.msra.mxu0 0.0
    %160 = vmatpush.msra.mxu0 0.0
    %161 = vmatpush.msra.mxu0 0.0
    %162 = vmatpush.msra.mxu0 0.0
    %163 = vmatpush.msra.mxu0 0.0
    %164 = vmatpush.msra.mxu0 0.0
    %165 = vmatpush.msra.mxu0 0.0
    %166 = vmatpush.msra.mxu0 0.0
    %167 = vmatpush.msra.mxu0 %v114
    %168 = vmatpush.msra.mxu0 %v113
    %169 = vmatpush.msra.mxu0 %v112
    %170 = vmatpush.msra.mxu0 %v111
    %171 = vmatmul.f32.gmra.mxu0 %v150
    %v172 = vpop.f32.mrf.mxu0
    %v173 = vadd.f32 %v144, %v172
    %174 = vmatmul.f32.gmra.mxu0 %v153
    %v175 = vpop.f32.mrf.mxu0
    %v176 = vadd.f32 %v147, %v175
    %177 = vdwg.mxu0
    %v178 = vld [vmem:[%s4] sm:$0x1]
    %v180 = vperm.slane %v178, 0
    %v182 = vadd.f32 %v173, %v180
    %v183 = vadd.f32 %v176, %v180
    %v184 = vld [vmem:[#allocation2] sm:$0xff]
    %v185 = vld [vmem:[#allocation2 + $0x8] sm:$0xff]
    %v186 = vld [vmem:[#allocation2 + $0x10] sm:$0xff]
    %v187 = vld [vmem:[#allocation2 + $0x18] sm:$0xff]
    %v189 = vsel %vm119, 0.0, 0
    %191 = vmatpush.msra.mxu0 0.0
    %192 = vmatpush.msra.mxu0 0.0
    %193 = vmatpush.msra.mxu0 0.0
    %194 = vmatpush.msra.mxu0 0.0
    %195 = vmatpush.msra.mxu0 0.0
    %196 = vmatpush.msra.mxu0 0.0
    %197 = vmatpush.msra.mxu0 0.0
    %198 = vmatpush.msra.mxu0 0.0
    %199 = vmatpush.msra.mxu0 0.0
    %200 = vmatpush.msra.mxu0 0.0
    %201 = vmatpush.msra.mxu0 0.0
    %202 = vmatpush.msra.mxu0 0.0
    %203 = vmatpush.msra.mxu0 %v187
    %204 = vmatpush.msra.mxu0 %v186
    %205 = vmatpush.msra.mxu0 %v185
    %206 = vmatpush.msra.mxu0 %v184
    %207 = vmatmul.f32.gmra.mxu0 %v189
    %v208 = vpop.f32.mrf.mxu0
    %v209 = vadd.f32 0.0, %v208
    %210 = vdwg.mxu0
    %v211 = vadd.f32 %v182, %v209
    %v212 = vsub.f32 0.0, %v211
    %v213 = vmul.f32 %v212, 1.442695
    %v214 = vpow.pop %v213
    %v215 = vadd.f32 %v214, 1.0
    %v216 = vrcp.pop %v215
    %v217 = vtanh.pop %v211
    %v218 = vsel %vm105, 1, 0
    %vm219 = vcmp.eq.s32.totalorder %v218, 1
    %v220 = vsel %vm219, %v217, %v216
    %221 = vrot.lane.b32.xlu0 %v220, 96
    %v222 = vpop.permute.xlu0 %221
    %223 = vrot.lane.b32.xlu0 %v220, 64
    %v224 = vpop.permute.xlu0 %223
    %225 = vrot.lane.b32.xlu0 %v220, 32
    %v226 = vpop.permute.xlu0 %225
    %v227 = vmul.f32 %v222, 0.0
    %v228 = vmul.f32 %v220, %v224
    %v229 = vadd.f32 %v227, %v228
    %v230 = vtanh.pop %v229
    %v231 = vmul.f32 %v226, %v230
    %v233 = vsel %vm119, %v231, 0
    %235 = vmatpush.msra.mxu0 0.0
    %236 = vmatpush.msra.mxu0 0.0
    %237 = vmatpush.msra.mxu0 0.0
    %238 = vmatpush.msra.mxu0 0.0
    %239 = vmatpush.msra.mxu0 0.0
    %240 = vmatpush.msra.mxu0 0.0
    %241 = vmatpush.msra.mxu0 0.0
    %242 = vmatpush.msra.mxu0 0.0
    %243 = vmatpush.msra.mxu0 0.0
    %244 = vmatpush.msra.mxu0 0.0
    %245 = vmatpush.msra.mxu0 0.0
    %246 = vmatpush.msra.mxu0 0.0
    %247 = vmatpush.msra.mxu0 %v187
    %248 = vmatpush.msra.mxu0 %v186
    %249 = vmatpush.msra.mxu0 %v185
    %250 = vmatpush.msra.mxu0 %v184
    %251 = vmatmul.f32.gmra.mxu0 %v233
    %v252 = vpop.f32.mrf.mxu0
    %v253 = vadd.f32 0.0, %v252
    %254 = vdwg.mxu0
    %v256 = vrot.slane %v253, 6
    %v258 = vadd.f32 %v182, %v256
    %v259 = vsub.f32 0.0, %v258
    %v260 = vmul.f32 %v259, 1.442695
    %v261 = vpow.pop %v260
    %v262 = vadd.f32 %v261, 1.0
    %v263 = vrcp.pop %v262
    %v264 = vtanh.pop %v258
    %v265 = vsel %vm219, %v264, %v263
    %v267 = vrot.slane %v265, 2
    %269 = vrot.lane.b32.xlu0 %v267, 96
    %v270 = vpop.permute.xlu0 %269
    %271 = vrot.lane.b32.xlu0 %v267, 64
    %v272 = vpop.permute.xlu0 %271
    %273 = vrot.lane.b32.xlu0 %v267, 32
    %v274 = vpop.permute.xlu0 %273
    %v275 = vmul.f32 %v270, %v229
    %v277 = vrot.slane %v272, 6
    %v279 = vmul.f32 %v265, %v277
    %v281 = vrot.slane %v279, 2
    %v283 = vadd.f32 %v275, %v281
    %v284 = vtanh.pop %v283
    %v285 = vmul.f32 %v274, %v284
    %v287 = vsel %vm119, %v285, 0
    %289 = vmatpush.msra.mxu0 0.0
    %290 = vmatpush.msra.mxu0 0.0
    %291 = vmatpush.msra.mxu0 0.0
    %292 = vmatpush.msra.mxu0 0.0
    %293 = vmatpush.msra.mxu0 0.0
    %294 = vmatpush.msra.mxu0 0.0
    %295 = vmatpush.msra.mxu0 0.0
    %296 = vmatpush.msra.mxu0 0.0
    %297 = vmatpush.msra.mxu0 0.0
    %298 = vmatpush.msra.mxu0 0.0
    %299 = vmatpush.msra.mxu0 0.0
    %300 = vmatpush.msra.mxu0 0.0
    %301 = vmatpush.msra.mxu0 %v187
    %302 = vmatpush.msra.mxu0 %v186
    %303 = vmatpush.msra.mxu0 %v185
    %304 = vmatpush.msra.mxu0 %v184
    %305 = vmatmul.f32.gmra.mxu0 %v287
    %v306 = vpop.f32.mrf.mxu0
    %v307 = vadd.f32 0.0, %v306
    %308 = vdwg.mxu0
    %v310 = vrot.slane %v307, 4
    %v312 = vadd.f32 %v182, %v310
    %v313 = vsub.f32 0.0, %v312
    %v314 = vmul.f32 %v313, 1.442695
    %v315 = vpow.pop %v314
    %v316 = vadd.f32 %v315, 1.0
    %v317 = vrcp.pop %v316
    %v318 = vtanh.pop %v312
    %v319 = vsel %vm219, %v318, %v317
    %v321 = vrot.slane %v319, 4
    %323 = vrot.lane.b32.xlu0 %v321, 96
    %v324 = vpop.permute.xlu0 %323
    %325 = vrot.lane.b32.xlu0 %v321, 64
    %v326 = vpop.permute.xlu0 %325
    %327 = vrot.lane.b32.xlu0 %v321, 32
    %v328 = vpop.permute.xlu0 %327
    %v329 = vmul.f32 %v324, %v283
    %v331 = vrot.slane %v326, 4
    %v333 = vmul.f32 %v319, %v331
    %v335 = vrot.slane %v333, 4
    %v337 = vadd.f32 %v329, %v335
    %v338 = vtanh.pop %v337
    %v339 = vmul.f32 %v328, %v338
    %v341 = vsel %vm119, %v339, 0
    %343 = vmatpush.msra.mxu0 0.0
    %344 = vmatpush.msra.mxu0 0.0
    %345 = vmatpush.msra.mxu0 0.0
    %346 = vmatpush.msra.mxu0 0.0
    %347 = vmatpush.msra.mxu0 0.0
    %348 = vmatpush.msra.mxu0 0.0
    %349 = vmatpush.msra.mxu0 0.0
    %350 = vmatpush.msra.mxu0 0.0
    %351 = vmatpush.msra.mxu0 0.0
    %352 = vmatpush.msra.mxu0 0.0
    %353 = vmatpush.msra.mxu0 0.0
    %354 = vmatpush.msra.mxu0 0.0
    %355 = vmatpush.msra.mxu0 %v187
    %356 = vmatpush.msra.mxu0 %v186
    %357 = vmatpush.msra.mxu0 %v185
    %358 = vmatpush.msra.mxu0 %v184
    %359 = vmatmul.f32.gmra.mxu0 %v341
    %v360 = vpop.f32.mrf.mxu0
    %v361 = vadd.f32 0.0, %v360
    %362 = vdwg.mxu0
    %v364 = vrot.slane %v361, 2
    %v366 = vadd.f32 %v182, %v364
    %v367 = vsub.f32 0.0, %v366
    %v368 = vmul.f32 %v367, 1.442695
    %v369 = vpow.pop %v368
    %v370 = vadd.f32 %v369, 1.0
    %v371 = vrcp.pop %v370
    %v372 = vtanh.pop %v366
    %v373 = vsel %vm219, %v372, %v371
    %v375 = vrot.slane %v373, 6
    %377 = vrot.lane.b32.xlu0 %v375, 96
    %v378 = vpop.permute.xlu0 %377
    %379 = vrot.lane.b32.xlu0 %v375, 64
    %v380 = vpop.permute.xlu0 %379
    %381 = vrot.lane.b32.xlu0 %v375, 32
    %v382 = vpop.permute.xlu0 %381
    %v383 = vmul.f32 %v378, %v337
    %v385 = vrot.slane %v380, 2
    %v387 = vmul.f32 %v373, %v385
    %v389 = vrot.slane %v387, 6
    %v391 = vadd.f32 %v383, %v389
    %v392 = vtanh.pop %v391
    %v393 = vmul.f32 %v382, %v392
    %v395 = vsel %vm119, %v393, 0
    %397 = vmatpush.msra.mxu0 0.0
    %398 = vmatpush.msra.mxu0 0.0
    %399 = vmatpush.msra.mxu0 0.0
    %400 = vmatpush.msra.mxu0 0.0
    %401 = vmatpush.msra.mxu0 0.0
    %402 = vmatpush.msra.mxu0 0.0
    %403 = vmatpush.msra.mxu0 0.0
    %404 = vmatpush.msra.mxu0 0.0
    %405 = vmatpush.msra.mxu0 0.0
    %406 = vmatpush.msra.mxu0 0.0
    %407 = vmatpush.msra.mxu0 0.0
    %408 = vmatpush.msra.mxu0 0.0
    %409 = vmatpush.msra.mxu0 %v187
    %410 = vmatpush.msra.mxu0 %v186
    %411 = vmatpush.msra.mxu0 %v185
    %412 = vmatpush.msra.mxu0 %v184
    %413 = vmatmul.f32.gmra.mxu0 %v395
    %v414 = vpop.f32.mrf.mxu0
    %v415 = vadd.f32 0.0, %v414
    %416 = vdwg.mxu0
    %v417 = vadd.f32 %v183, %v415
    %v418 = vsub.f32 0.0, %v417
    %v419 = vmul.f32 %v418, 1.442695
    %v420 = vpow.pop %v419
    %v421 = vadd.f32 %v420, 1.0
    %v422 = vrcp.pop %v421
    %v423 = vtanh.pop %v417
    %v424 = vsel %vm219, %v423, %v422
    %425 = vrot.lane.b32.xlu0 %v424, 96
    %v426 = vpop.permute.xlu0 %425
    %427 = vrot.lane.b32.xlu0 %v424, 64
    %v428 = vpop.permute.xlu0 %427
    %429 = vrot.lane.b32.xlu0 %v424, 32
    %v430 = vpop.permute.xlu0 %429
    %v431 = vmul.f32 %v426, %v391
    %v432 = vmul.f32 %v424, %v428
    %v433 = vadd.f32 %v431, %v432
    %v434 = vtanh.pop %v433
    %v435 = vmul.f32 %v430, %v434
    %v437 = vsel %vm119, %v435, 0
    %439 = vmatpush.msra.mxu0 0.0
    %440 = vmatpush.msra.mxu0 0.0
    %441 = vmatpush.msra.mxu0 0.0
    %442 = vmatpush.msra.mxu0 0.0
    %443 = vmatpush.msra.mxu0 0.0
    %444 = vmatpush.msra.mxu0 0.0
    %445 = vmatpush.msra.mxu0 0.0
    %446 = vmatpush.msra.mxu0 0.0
    %447 = vmatpush.msra.mxu0 0.0
    %448 = vmatpush.msra.mxu0 0.0
    %449 = vmatpush.msra.mxu0 0.0
    %450 = vmatpush.msra.mxu0 0.0
    %451 = vmatpush.msra.mxu0 %v187
    %452 = vmatpush.msra.mxu0 %v186
    %453 = vmatpush.msra.mxu0 %v185
    %454 = vmatpush.msra.mxu0 %v184
    %455 = vmatmul.f32.gmra.mxu0 %v437
    %v456 = vpop.f32.mrf.mxu0
    %v457 = vadd.f32 0.0, %v456
    %458 = vdwg.mxu0
    %v460 = vrot.slane %v457, 6
    %v462 = vadd.f32 %v183, %v460
    %v463 = vsub.f32 0.0, %v462
    %v464 = vmul.f32 %v463, 1.442695
    %v465 = vpow.pop %v464
    %v466 = vadd.f32 %v465, 1.0
    %v467 = vrcp.pop %v466
    %v468 = vtanh.pop %v462
    %v469 = vsel %vm219, %v468, %v467
    %v471 = vrot.slane %v469, 2
    %473 = vrot.lane.b32.xlu0 %v471, 96
    %v474 = vpop.permute.xlu0 %473
    %475 = vrot.lane.b32.xlu0 %v471, 64
    %v476 = vpop.permute.xlu0 %475
    %477 = vrot.lane.b32.xlu0 %v471, 32
    %v478 = vpop.permute.xlu0 %477
    %v479 = vmul.f32 %v474, %v433
    %v481 = vrot.slane %v476, 6
    %v483 = vmul.f32 %v469, %v481
    %v485 = vrot.slane %v483, 2
    %v487 = vadd.f32 %v479, %v485
    %v488 = vtanh.pop %v487
    %v489 = vmul.f32 %v478, %v488
    %v491 = vsel %vm119, %v489, 0
    %493 = vmatpush.msra.mxu0 0.0
    %494 = vmatpush.msra.mxu0 0.0
    %495 = vmatpush.msra.mxu0 0.0
    %496 = vmatpush.msra.mxu0 0.0
    %497 = vmatpush.msra.mxu0 0.0
    %498 = vmatpush.msra.mxu0 0.0
    %499 = vmatpush.msra.mxu0 0.0
    %500 = vmatpush.msra.mxu0 0.0
    %501 = vmatpush.msra.mxu0 0.0
    %502 = vmatpush.msra.mxu0 0.0
    %503 = vmatpush.msra.mxu0 0.0
    %504 = vmatpush.msra.mxu0 0.0
    %505 = vmatpush.msra.mxu0 %v187
    %506 = vmatpush.msra.mxu0 %v186
    %507 = vmatpush.msra.mxu0 %v185
    %508 = vmatpush.msra.mxu0 %v184
    %509 = vmatmul.f32.gmra.mxu0 %v491
    %v510 = vpop.f32.mrf.mxu0
    %v511 = vadd.f32 0.0, %v510
    %512 = vdwg.mxu0
    %v514 = vrot.slane %v511, 4
    %v516 = vadd.f32 %v183, %v514
    %v517 = vsub.f32 0.0, %v516
    %v518 = vmul.f32 %v517, 1.442695
    %v519 = vpow.pop %v518
    %v520 = vadd.f32 %v519, 1.0
    %v521 = vrcp.pop %v520
    %v522 = vtanh.pop %v516
    %v523 = vsel %vm219, %v522, %v521
    %v525 = vrot.slane %v523, 4
    %527 = vrot.lane.b32.xlu0 %v525, 96
    %v528 = vpop.permute.xlu0 %527
    %529 = vrot.lane.b32.xlu0 %v525, 64
    %v530 = vpop.permute.xlu0 %529
    %531 = vrot.lane.b32.xlu0 %v525, 32
    %v532 = vpop.permute.xlu0 %531
    %v533 = vmul.f32 %v528, %v487
    %v535 = vrot.slane %v530, 4
    %v537 = vmul.f32 %v523, %v535
    %v539 = vrot.slane %v537, 4
    %v541 = vadd.f32 %v533, %v539
    %v542 = vtanh.pop %v541
    %v543 = vmul.f32 %v532, %v542
    %v545 = vsel %vm119, %v543, 0
    %547 = vmatpush.msra.mxu0 0.0
    %548 = vmatpush.msra.mxu0 0.0
    %549 = vmatpush.msra.mxu0 0.0
    %550 = vmatpush.msra.mxu0 0.0
    %551 = vmatpush.msra.mxu0 0.0
    %552 = vmatpush.msra.mxu0 0.0
    %553 = vmatpush.msra.mxu0 0.0
    %554 = vmatpush.msra.mxu0 0.0
    %555 = vmatpush.msra.mxu0 0.0
    %556 = vmatpush.msra.mxu0 0.0
    %557 = vmatpush.msra.mxu0 0.0
    %558 = vmatpush.msra.mxu0 0.0
    %559 = vmatpush.msra.mxu0 %v187
    %560 = vmatpush.msra.mxu0 %v186
    %561 = vmatpush.msra.mxu0 %v185
    %562 = vmatpush.msra.mxu0 %v184
    %563 = vmatmul.f32.gmra.mxu0 %v545
    %v564 = vpop.f32.mrf.mxu0
    %v565 = vadd.f32 0.0, %v564
    %566 = vdwg.mxu0
    %v568 = vrot.slane %v565, 2
    %v570 = vadd.f32 %v183, %v568
    %v571 = vsub.f32 0.0, %v570
    %v572 = vmul.f32 %v571, 1.442695
    %v573 = vpow.pop %v572
    %v574 = vadd.f32 %v573, 1.0
    %v575 = vrcp.pop %v574
    %v576 = vtanh.pop %v570
    %v577 = vsel %vm219, %v576, %v575
    %v579 = vrot.slane %v577, 6
    %581 = vrot.lane.b32.xlu0 %v579, 96
    %v582 = vpop.permute.xlu0 %581
    %583 = vrot.lane.b32.xlu0 %v579, 64
    %v584 = vpop.permute.xlu0 %583
    %585 = vrot.lane.b32.xlu0 %v579, 32
    %v586 = vpop.permute.xlu0 %585
    %v587 = vmul.f32 %v582, %v541
    %v589 = vrot.slane %v584, 2
    %v591 = vmul.f32 %v577, %v589
    %v593 = vrot.slane %v591, 6
    %v595 = vadd.f32 %v587, %v593
    %v596 = vtanh.pop %v595
    %v597 = vmul.f32 %v586, %v596
    %v598 = vrot.slane %v285, 6
    %v600 = vrot.slane %v339, 4
    %v602 = vrot.slane %v393, 2
    %v604 = vrot.slane %v489, 6
    %v606 = vrot.slane %v543, 4
    %v609 = vrot.slane %v597, 2
    %vm611 = vcmask 1041408
    %v612 = vsel %vm611, %v231, %v598
    %vm613 = vcmask 1043456
    %v614 = vsel %vm613, %v612, %v600
    %vm615 = vcmask 1045504
    %v616 = vsel %vm615, %v614, %v602
    %v617 = vsel %vm611, %v435, %v604
    %v618 = vsel %vm613, %v617, %v606
    %v619 = vsel %vm615, %v618, %v609
    %v620 = vrot.slane %v543, 6
    %v622 = vrot.slane %v489, 4
    %v624 = vrot.slane %v435, 2
    %v626 = vrot.slane %v339, 6
    %v628 = vrot.slane %v285, 4
    %v630 = vrot.slane %v231, 2
    %v632 = vsel %vm611, %v597, %v620
    %v633 = vsel %vm613, %v632, %v622
    %v634 = vsel %vm615, %v633, %v624
    %v635 = vsel %vm611, %v393, %v626
    %v636 = vsel %vm613, %v635, %v628
    %v637 = vsel %vm615, %v636, %v630
    %v638 = vld [vmem:[#allocation5] sm:$0xff]
    %v639 = vld [vmem:[#allocation5 + $0x8] sm:$0xff]
    %v640 = vld [vmem:[#allocation5 + $0x10] sm:$0xff]
    %v641 = vld [vmem:[#allocation5 + $0x18] sm:$0xff]
    %v642 = vld [vmem:[#allocation7] sm:$0xff]
    %v643 = vld [vmem:[#allocation7 + $0x8] sm:$0xff]
    %v644 = vld [vmem:[#allocation7 + $0x10] sm:$0xff]
    %v645 = vld [vmem:[#allocation7 + $0x18] sm:$0xff]
    %v647 = vsel %vm119, %v634, 0
    %v650 = vsel %vm119, %v637, 0
    %652 = vmatpush.msra.mxu0 0.0
    %653 = vmatpush.msra.mxu0 0.0
    %654 = vmatpush.msra.mxu0 0.0
    %655 = vmatpush.msra.mxu0 0.0
    %656 = vmatpush.msra.mxu0 0.0
    %657 = vmatpush.msra.mxu0 0.0
    %658 = vmatpush.msra.mxu0 0.0
    %659 = vmatpush.msra.mxu0 0.0
    %660 = vmatpush.msra.mxu0 0.0
    %661 = vmatpush.msra.mxu0 0.0
    %662 = vmatpush.msra.mxu0 0.0
    %663 = vmatpush.msra.mxu0 0.0
    %664 = vmatpush.msra.mxu0 %v645
    %665 = vmatpush.msra.mxu0 %v644
    %666 = vmatpush.msra.mxu0 %v643
    %667 = vmatpush.msra.mxu0 %v642
    %668 = vmatmul.f32.gmra.mxu0 %v647
    %v669 = vpop.f32.mrf.mxu0
    %v670 = vadd.f32 0.0, %v669
    %671 = vmatmul.f32.gmra.mxu0 %v650
    %v672 = vpop.f32.mrf.mxu0
    %v673 = vadd.f32 0.0, %v672
    %674 = vdwg.mxu0
    %v676 = vsel %vm119, %v616, 0
    %v679 = vsel %vm119, %v619, 0
    %681 = vmatpush.msra.mxu0 0.0
    %682 = vmatpush.msra.mxu0 0.0
    %683 = vmatpush.msra.mxu0 0.0
    %684 = vmatpush.msra.mxu0 0.0
    %685 = vmatpush.msra.mxu0 0.0
    %686 = vmatpush.msra.mxu0 0.0
    %687 = vmatpush.msra.mxu0 0.0
    %688 = vmatpush.msra.mxu0 0.0
    %689 = vmatpush.msra.mxu0 0.0
    %690 = vmatpush.msra.mxu0 0.0
    %691 = vmatpush.msra.mxu0 0.0
    %692 = vmatpush.msra.mxu0 0.0
    %693 = vmatpush.msra.mxu0 %v641
    %694 = vmatpush.msra.mxu0 %v640
    %695 = vmatpush.msra.mxu0 %v639
    %696 = vmatpush.msra.mxu0 %v638
    %697 = vmatmul.f32.gmra.mxu0 %v676
    %v698 = vpop.f32.mrf.mxu0
    %v699 = vadd.f32 %v670, %v698
    %700 = vmatmul.f32.gmra.mxu0 %v679
    %v701 = vpop.f32.mrf.mxu0
    %v702 = vadd.f32 %v673, %v701
    %703 = vdwg.mxu0
    %v704 = vld [vmem:[%s8] sm:$0x1]
    %v706 = vperm.slane %v704, 0
    %v708 = vadd.f32 %v699, %v706
    %v709 = vadd.f32 %v702, %v706
    %v710 = vld [vmem:[#allocation8] sm:$0xff]
    %v711 = vld [vmem:[#allocation8 + $0x8] sm:$0xff]
    %v712 = vld [vmem:[#allocation8 + $0x10] sm:$0xff]
    %v713 = vld [vmem:[#allocation8 + $0x18] sm:$0xff]
    %714 = vmatpush.msra.mxu0 0.0
    %715 = vmatpush.msra.mxu0 0.0
    %716 = vmatpush.msra.mxu0 0.0
    %717 = vmatpush.msra.mxu0 0.0
    %718 = vmatpush.msra.mxu0 0.0
    %719 = vmatpush.msra.mxu0 0.0
    %720 = vmatpush.msra.mxu0 0.0
    %721 = vmatpush.msra.mxu0 0.0
    %722 = vmatpush.msra.mxu0 0.0
    %723 = vmatpush.msra.mxu0 0.0
    %724 = vmatpush.msra.mxu0 0.0
    %725 = vmatpush.msra.mxu0 0.0
    %726 = vmatpush.msra.mxu0 %v713
    %727 = vmatpush.msra.mxu0 %v712
    %728 = vmatpush.msra.mxu0 %v711
    %729 = vmatpush.msra.mxu0 %v710
    %730 = vmatmul.f32.gmra.mxu0 %v189
    %v731 = vpop.f32.mrf.mxu0
    %v732 = vadd.f32 0.0, %v731
    %733 = vdwg.mxu0
    %v734 = vadd.f32 %v708, %v732
    %v735 = vsub.f32 0.0, %v734
    %v736 = vmul.f32 %v735, 1.442695
    %v737 = vpow.pop %v736
    %v738 = vadd.f32 %v737, 1.0
    %v739 = vrcp.pop %v738
    %v740 = vtanh.pop %v734
    %v741 = vsel %vm219, %v740, %v739
    %742 = vrot.lane.b32.xlu0 %v741, 96
    %v743 = vpop.permute.xlu0 %742
    %744 = vrot.lane.b32.xlu0 %v741, 64
    %v745 = vpop.permute.xlu0 %744
    %746 = vrot.lane.b32.xlu0 %v741, 32
    %v747 = vpop.permute.xlu0 %746
    %v748 = vmul.f32 %v743, 0.0
    %v749 = vmul.f32 %v741, %v745
    %v750 = vadd.f32 %v748, %v749
    %v751 = vtanh.pop %v750
    %v752 = vmul.f32 %v747, %v751
    %v754 = vsel %vm119, %v752, 0
    %756 = vmatpush.msra.mxu0 0.0
    %757 = vmatpush.msra.mxu0 0.0
    %758 = vmatpush.msra.mxu0 0.0
    %759 = vmatpush.msra.mxu0 0.0
    %760 = vmatpush.msra.mxu0 0.0
    %761 = vmatpush.msra.mxu0 0.0
    %762 = vmatpush.msra.mxu0 0.0
    %763 = vmatpush.msra.mxu0 0.0
    %764 = vmatpush.msra.mxu0 0.0
    %765 = vmatpush.msra.mxu0 0.0
    %766 = vmatpush.msra.mxu0 0.0
    %767 = vmatpush.msra.mxu0 0.0
    %768 = vmatpush.msra.mxu0 %v713
    %769 = vmatpush.msra.mxu0 %v712
    %770 = vmatpush.msra.mxu0 %v711
    %771 = vmatpush.msra.mxu0 %v710
    %772 = vmatmul.f32.gmra.mxu0 %v754
    %v773 = vpop.f32.mrf.mxu0
    %v774 = vadd.f32 0.0, %v773
    %775 = vdwg.mxu0
    %v777 = vrot.slane %v774, 6
    %v779 = vadd.f32 %v708, %v777
    %v780 = vsub.f32 0.0, %v779
    %v781 = vmul.f32 %v780, 1.442695
    %v782 = vpow.pop %v781
    %v783 = vadd.f32 %v782, 1.0
    %v784 = vrcp.pop %v783
    %v785 = vtanh.pop %v779
    %v786 = vsel %vm219, %v785, %v784
    %v788 = vrot.slane %v786, 2
    %790 = vrot.lane.b32.xlu0 %v788, 96
    %v791 = vpop.permute.xlu0 %790
    %792 = vrot.lane.b32.xlu0 %v788, 64
    %v793 = vpop.permute.xlu0 %792
    %794 = vrot.lane.b32.xlu0 %v788, 32
    %v795 = vpop.permute.xlu0 %794
    %v796 = vmul.f32 %v791, %v750
    %v798 = vrot.slane %v793, 6
    %v800 = vmul.f32 %v786, %v798
    %v802 = vrot.slane %v800, 2
    %v804 = vadd.f32 %v796, %v802
    %v805 = vtanh.pop %v804
    %v806 = vmul.f32 %v795, %v805
    %v808 = vsel %vm119, %v806, 0
    %810 = vmatpush.msra.mxu0 0.0
    %811 = vmatpush.msra.mxu0 0.0
    %812 = vmatpush.msra.mxu0 0.0
    %813 = vmatpush.msra.mxu0 0.0
    %814 = vmatpush.msra.mxu0 0.0
    %815 = vmatpush.msra.mxu0 0.0
    %816 = vmatpush.msra.mxu0 0.0
    %817 = vmatpush.msra.mxu0 0.0
    %818 = vmatpush.msra.mxu0 0.0
    %819 = vmatpush.msra.mxu0 0.0
    %820 = vmatpush.msra.mxu0 0.0
    %821 = vmatpush.msra.mxu0 0.0
    %822 = vmatpush.msra.mxu0 %v713
    %823 = vmatpush.msra.mxu0 %v712
    %824 = vmatpush.msra.mxu0 %v711
    %825 = vmatpush.msra.mxu0 %v710
    %826 = vmatmul.f32.gmra.mxu0 %v808
    %v827 = vpop.f32.mrf.mxu0
    %v828 = vadd.f32 0.0, %v827
    %829 = vdwg.mxu0
    %v831 = vrot.slane %v828, 4
    %v833 = vadd.f32 %v708, %v831
    %v834 = vsub.f32 0.0, %v833
    %v835 = vmul.f32 %v834, 1.442695
    %v836 = vpow.pop %v835
    %v837 = vadd.f32 %v836, 1.0
    %v838 = vrcp.pop %v837
    %v839 = vtanh.pop %v833
    %v840 = vsel %vm219, %v839, %v838
    %v842 = vrot.slane %v840, 4
    %844 = vrot.lane.b32.xlu0 %v842, 96
    %v845 = vpop.permute.xlu0 %844
    %846 = vrot.lane.b32.xlu0 %v842, 64
    %v847 = vpop.permute.xlu0 %846
    %848 = vrot.lane.b32.xlu0 %v842, 32
    %v849 = vpop.permute.xlu0 %848
    %v850 = vmul.f32 %v845, %v804
    %v852 = vrot.slane %v847, 4
    %v854 = vmul.f32 %v840, %v852
    %v856 = vrot.slane %v854, 4
    %v858 = vadd.f32 %v850, %v856
    %v859 = vtanh.pop %v858
    %v860 = vmul.f32 %v849, %v859
    %v862 = vsel %vm119, %v860, 0
    %864 = vmatpush.msra.mxu0 0.0
    %865 = vmatpush.msra.mxu0 0.0
    %866 = vmatpush.msra.mxu0 0.0
    %867 = vmatpush.msra.mxu0 0.0
    %868 = vmatpush.msra.mxu0 0.0
    %869 = vmatpush.msra.mxu0 0.0
    %870 = vmatpush.msra.mxu0 0.0
    %871 = vmatpush.msra.mxu0 0.0
    %872 = vmatpush.msra.mxu0 0.0
    %873 = vmatpush.msra.mxu0 0.0
    %874 = vmatpush.msra.mxu0 0.0
    %875 = vmatpush.msra.mxu0 0.0
    %876 = vmatpush.msra.mxu0 %v713
    %877 = vmatpush.msra.mxu0 %v712
    %878 = vmatpush.msra.mxu0 %v711
    %879 = vmatpush.msra.mxu0 %v710
    %880 = vmatmul.f32.gmra.mxu0 %v862
    %v881 = vpop.f32.mrf.mxu0
    %v882 = vadd.f32 0.0, %v881
    %883 = vdwg.mxu0
    %v885 = vrot.slane %v882, 2
    %v887 = vadd.f32 %v708, %v885
    %v888 = vsub.f32 0.0, %v887
    %v889 = vmul.f32 %v888, 1.442695
    %v890 = vpow.pop %v889
    %v891 = vadd.f32 %v890, 1.0
    %v892 = vrcp.pop %v891
    %v893 = vtanh.pop %v887
    %v894 = vsel %vm219, %v893, %v892
    %v896 = vrot.slane %v894, 6
    %898 = vrot.lane.b32.xlu0 %v896, 96
    %v899 = vpop.permute.xlu0 %898
    %900 = vrot.lane.b32.xlu0 %v896, 64
    %v901 = vpop.permute.xlu0 %900
    %902 = vrot.lane.b32.xlu0 %v896, 32
    %v903 = vpop.permute.xlu0 %902
    %v904 = vmul.f32 %v899, %v858
    %v906 = vrot.slane %v901, 2
    %v908 = vmul.f32 %v894, %v906
    %v910 = vrot.slane %v908, 6
    %v912 = vadd.f32 %v904, %v910
    %v913 = vtanh.pop %v912
    %v914 = vmul.f32 %v903, %v913
    %v916 = vsel %vm119, %v914, 0
    %918 = vmatpush.msra.mxu0 0.0
    %919 = vmatpush.msra.mxu0 0.0
    %920 = vmatpush.msra.mxu0 0.0
    %921 = vmatpush.msra.mxu0 0.0
    %922 = vmatpush.msra.mxu0 0.0
    %923 = vmatpush.msra.mxu0 0.0
    %924 = vmatpush.msra.mxu0 0.0
    %925 = vmatpush.msra.mxu0 0.0
    %926 = vmatpush.msra.mxu0 0.0
    %927 = vmatpush.msra.mxu0 0.0
    %928 = vmatpush.msra.mxu0 0.0
    %929 = vmatpush.msra.mxu0 0.0
    %930 = vmatpush.msra.mxu0 %v713
    %931 = vmatpush.msra.mxu0 %v712
    %932 = vmatpush.msra.mxu0 %v711
    %933 = vmatpush.msra.mxu0 %v710
    %934 = vmatmul.f32.gmra.mxu0 %v916
    %v935 = vpop.f32.mrf.mxu0
    %v936 = vadd.f32 0.0, %v935
    %937 = vdwg.mxu0
    %v938 = vadd.f32 %v709, %v936
    %v939 = vsub.f32 0.0, %v938
    %v940 = vmul.f32 %v939, 1.442695
    %v941 = vpow.pop %v940
    %v942 = vadd.f32 %v941, 1.0
    %v943 = vrcp.pop %v942
    %v944 = vtanh.pop %v938
    %v945 = vsel %vm219, %v944, %v943
    %946 = vrot.lane.b32.xlu0 %v945, 96
    %v947 = vpop.permute.xlu0 %946
    %948 = vrot.lane.b32.xlu0 %v945, 64
    %v949 = vpop.permute.xlu0 %948
    %950 = vrot.lane.b32.xlu0 %v945, 32
    %v951 = vpop.permute.xlu0 %950
    %v952 = vmul.f32 %v947, %v912
    %v953 = vmul.f32 %v945, %v949
    %v954 = vadd.f32 %v952, %v953
    %v955 = vtanh.pop %v954
    %v956 = vmul.f32 %v951, %v955
    %v958 = vsel %vm119, %v956, 0
    %960 = vmatpush.msra.mxu0 0.0
    %961 = vmatpush.msra.mxu0 0.0
    %962 = vmatpush.msra.mxu0 0.0
    %963 = vmatpush.msra.mxu0 0.0
    %964 = vmatpush.msra.mxu0 0.0
    %965 = vmatpush.msra.mxu0 0.0
    %966 = vmatpush.msra.mxu0 0.0
    %967 = vmatpush.msra.mxu0 0.0
    %968 = vmatpush.msra.mxu0 0.0
    %969 = vmatpush.msra.mxu0 0.0
    %970 = vmatpush.msra.mxu0 0.0
    %971 = vmatpush.msra.mxu0 0.0
    %972 = vmatpush.msra.mxu0 %v713
    %973 = vmatpush.msra.mxu0 %v712
    %974 = vmatpush.msra.mxu0 %v711
    %975 = vmatpush.msra.mxu0 %v710
    %976 = vmatmul.f32.gmra.mxu0 %v958
    %v977 = vpop.f32.mrf.mxu0
    %v978 = vadd.f32 0.0, %v977
    %979 = vdwg.mxu0
    %v981 = vrot.slane %v978, 6
    %v983 = vadd.f32 %v709, %v981
    %v984 = vsub.f32 0.0, %v983
    %v985 = vmul.f32 %v984, 1.442695
    %v986 = vpow.pop %v985
    %v987 = vadd.f32 %v986, 1.0
    %v988 = vrcp.pop %v987
    %v989 = vtanh.pop %v983
    %v990 = vsel %vm219, %v989, %v988
    %v992 = vrot.slane %v990, 2
    %994 = vrot.lane.b32.xlu0 %v992, 96
    %v995 = vpop.permute.xlu0 %994
    %996 = vrot.lane.b32.xlu0 %v992, 64
    %v997 = vpop.permute.xlu0 %996
    %998 = vrot.lane.b32.xlu0 %v992, 32
    %v999 = vpop.permute.xlu0 %998
    %v1000 = vmul.f32 %v995, %v954
    %v1002 = vrot.slane %v997, 6
    %v1004 = vmul.f32 %v990, %v1002
    %v1006 = vrot.slane %v1004, 2
    %v1008 = vadd.f32 %v1000, %v1006
    %v1009 = vtanh.pop %v1008
    %v1010 = vmul.f32 %v999, %v1009
    %v1012 = vsel %vm119, %v1010, 0
    %1014 = vmatpush.msra.mxu0 0.0
    %1015 = vmatpush.msra.mxu0 0.0
    %1016 = vmatpush.msra.mxu0 0.0
    %1017 = vmatpush.msra.mxu0 0.0
    %1018 = vmatpush.msra.mxu0 0.0
    %1019 = vmatpush.msra.mxu0 0.0
    %1020 = vmatpush.msra.mxu0 0.0
    %1021 = vmatpush.msra.mxu0 0.0
    %1022 = vmatpush.msra.mxu0 0.0
    %1023 = vmatpush.msra.mxu0 0.0
    %1024 = vmatpush.msra.mxu0 0.0
    %1025 = vmatpush.msra.mxu0 0.0
    %1026 = vmatpush.msra.mxu0 %v713
    %1027 = vmatpush.msra.mxu0 %v712
    %1028 = vmatpush.msra.mxu0 %v711
    %1029 = vmatpush.msra.mxu0 %v710
    %1030 = vmatmul.f32.gmra.mxu0 %v1012
    %v1031 = vpop.f32.mrf.mxu0
    %v1032 = vadd.f32 0.0, %v1031
    %1033 = vdwg.mxu0
    %v1035 = vrot.slane %v1032, 4
    %v1037 = vadd.f32 %v709, %v1035
    %v1038 = vsub.f32 0.0, %v1037
    %v1039 = vmul.f32 %v1038, 1.442695
    %v1040 = vpow.pop %v1039
    %v1041 = vadd.f32 %v1040, 1.0
    %v1042 = vrcp.pop %v1041
    %v1043 = vtanh.pop %v1037
    %v1044 = vsel %vm219, %v1043, %v1042
    %v1046 = vrot.slane %v1044, 4
    %1048 = vrot.lane.b32.xlu0 %v1046, 96
    %v1049 = vpop.permute.xlu0 %1048
    %1050 = vrot.lane.b32.xlu0 %v1046, 64
    %v1051 = vpop.permute.xlu0 %1050
    %1052 = vrot.lane.b32.xlu0 %v1046, 32
    %v1053 = vpop.permute.xlu0 %1052
    %v1054 = vmul.f32 %v1049, %v1008
    %v1056 = vrot.slane %v1051, 4
    %v1058 = vmul.f32 %v1044, %v1056
    %v1060 = vrot.slane %v1058, 4
    %v1062 = vadd.f32 %v1054, %v1060
    %v1063 = vtanh.pop %v1062
    %v1064 = vmul.f32 %v1053, %v1063
    %v1066 = vsel %vm119, %v1064, 0
    %1068 = vmatpush.msra.mxu0 0.0
    %1069 = vmatpush.msra.mxu0 0.0
    %1070 = vmatpush.msra.mxu0 0.0
    %1071 = vmatpush.msra.mxu0 0.0
    %1072 = vmatpush.msra.mxu0 0.0
    %1073 = vmatpush.msra.mxu0 0.0
    %1074 = vmatpush.msra.mxu0 0.0
    %1075 = vmatpush.msra.mxu0 0.0
    %1076 = vmatpush.msra.mxu0 0.0
    %1077 = vmatpush.msra.mxu0 0.0
    %1078 = vmatpush.msra.mxu0 0.0
    %1079 = vmatpush.msra.mxu0 0.0
    %1080 = vmatpush.msra.mxu0 %v713
    %1081 = vmatpush.msra.mxu0 %v712
    %1082 = vmatpush.msra.mxu0 %v711
    %1083 = vmatpush.msra.mxu0 %v710
    %1084 = vmatmul.f32.gmra.mxu0 %v1066
    %v1085 = vpop.f32.mrf.mxu0
    %v1086 = vadd.f32 0.0, %v1085
    %1087 = vdwg.mxu0
    %v1089 = vrot.slane %v1086, 2
    %v1091 = vadd.f32 %v709, %v1089
    %v1092 = vsub.f32 0.0, %v1091
    %v1093 = vmul.f32 %v1092, 1.442695
    %v1094 = vpow.pop %v1093
    %v1095 = vadd.f32 %v1094, 1.0
    %v1096 = vrcp.pop %v1095
    %v1097 = vtanh.pop %v1091
    %v1098 = vsel %vm219, %v1097, %v1096
    %v1100 = vrot.slane %v1098, 6
    %1102 = vrot.lane.b32.xlu0 %v1100, 96
    %v1103 = vpop.permute.xlu0 %1102
    %1104 = vrot.lane.b32.xlu0 %v1100, 64
    %v1105 = vpop.permute.xlu0 %1104
    %1106 = vrot.lane.b32.xlu0 %v1100, 32
    %v1107 = vpop.permute.xlu0 %1106
    %v1108 = vmul.f32 %v1103, %v1062
    %v1110 = vrot.slane %v1105, 2
    %v1112 = vmul.f32 %v1098, %v1110
    %v1114 = vrot.slane %v1112, 6
    %v1116 = vadd.f32 %v1108, %v1114
    %v1117 = vtanh.pop %v1116
    %v1118 = vmul.f32 %v1107, %v1117
    %v1119 = vsel %vm106, 1, 0
    %vm1120 = vcmp.eq.s32.totalorder %v1119, 1
    %v1121 = vsel %vm1120, %v752, %v1118
    %v1122 = vsel %vm1120, %v806, %v1064
    %v1123 = vsel %vm1120, %v860, %v1010
    %v1124 = vsel %vm1120, %v914, %v956
    %v1125 = vsel %vm1120, %v956, %v914
    %v1126 = vsel %vm1120, %v1010, %v860
    %v1127 = vsel %vm1120, %v1064, %v806
    %v1128 = vsel %vm1120, %v1118, %v752
    %1130 = vrot.lane.b32.xlu0 %v1122, 32
    %v1131 = vpop.permute.xlu0 %1130
    %1134 = vrot.lane.b32.xlu0 %v1123, 64
    %v1135 = vpop.permute.xlu0 %1134
    %1138 = vrot.lane.b32.xlu0 %v1124, 96
    %v1139 = vpop.permute.xlu0 %1138
    %1142 = vrot.lane.b32.xlu0 %v1126, 32
    %v1143 = vpop.permute.xlu0 %1142
    %1146 = vrot.lane.b32.xlu0 %v1127, 64
    %v1147 = vpop.permute.xlu0 %1146
    %1150 = vrot.lane.b32.xlu0 %v1128, 96
    %v1151 = vpop.permute.xlu0 %1150
    %v1153 = vsel %vm119, %v1121, %v1131
    %vm1154 = vcmask 523264
    %v1155 = vsel %vm1154, %v1153, %v1135
    %vm1156 = vcmask 785408
    %v1157 = vsel %vm1156, %v1155, %v1139
    %v1158 = vsel %vm119, %v1125, %v1143
    %v1159 = vsel %vm1154, %v1158, %v1147
    %v1160 = vsel %vm1156, %v1159, %v1151
    %v1163 = vrot.slane %v1160, 6
    %v1164 = vsel %vm611, %v1157, %v1163
    %1166 = vst [vmem:[%s10] sm:$0xf] %v1164
    %v1167 = vmax.f32 %v752, %v806
    %v1168 = vmax.f32 %v1167, %v860
    %v1169 = vmax.f32 %v1168, %v914
    %v1170 = vmax.f32 %v1169, %v956
    %v1171 = vmax.f32 %v1170, %v1010
    %v1172 = vmax.f32 %v1171, %v1064
    %v1173 = vmax.f32 %v1172, %v1118
    %vm1174 = vcmask 254976
    %1175 = vst.msk [vmem:[#allocation10] sm:$0x3] %vm1174, %v1173
    // Predicated region
    $region58: #{base_lstm_encoder_forward.1} parent=1 // pred_check
      _
    $region59: #{base_lstm_encoder_forward.1} parent=1 // pred_check_branch
      %1177 = sbr.rel (0) target = $region61
    $region60: #{base_lstm_encoder_forward.1} parent=1 // pred_region
      _
    $region61: #{base_lstm_encoder_forward.1} parent=1 // pred_fallthru
      _
    // Predicated region
    $region62: #{base_lstm_encoder_forward.1} parent=1 // pred_check
      _
    $region63: #{base_lstm_encoder_forward.1} parent=1 // pred_check_branch
      %1179 = sbr.rel (0) target = $region65
    $region64: #{base_lstm_encoder_forward.1} parent=1 // pred_region
      %1181 = vsyncadd [#allocation4], 0
      %s1183 = sshll.u32 [#allocation10], 4
      %s1184 = int_to_ptr.vmem [resolvable:$true] %s1183
      %s1185 = sshll.u32 %s11, 4
      %s1186 = int_to_ptr.hbm [resolvable:$true] %s1185
      %1188 = dma.vmem_to_hbm [thread:$0]  %s1184, 32, %s1186, [#allocation4]
    $region65: #{base_lstm_encoder_forward.1} parent=1 // pred_fallthru
      _
    // Predicated region
    $region66: #{base_lstm_encoder_forward.1} parent=1 // pred_check
      _
    $region67: #{base_lstm_encoder_forward.1} parent=1 // pred_check_branch
      %1190 = sbr.rel (0) target = $region69
    $region68: #{base_lstm_encoder_forward.1} parent=1 // pred_region
      _
    $region69: #{base_lstm_encoder_forward.1} parent=1 // pred_fallthru
      _
    // Predicated region
    $region70: #{base_lstm_encoder_forward.1} parent=1 // pred_check
      _
    $region71: #{base_lstm_encoder_forward.1} parent=1 // pred_check_branch
      %1192 = sbr.rel (0) target = $region73
    $region72: #{base_lstm_encoder_forward.1} parent=1 // pred_region
      %1194 = dma.done [#allocation4], 32
    $region73: #{base_lstm_encoder_forward.1} parent=1 // pred_fallthru
      _
    %1195 = vsyncpa [#allocation3], 1
    %1196 = vsyncpa [#allocation6], 1
    %1197 = vsyncpa [#allocation9], 1
    %1198 = vsyncpa [#allocation4], 1

</llo_original>
